<compile_context>
chip_gen: v6e
topology: v6e:2x2x1
jax: 0.10.0
libtpu: 0.0.40
codegen_flags: <defaults>
</compile_context>

<pallas_src>
import functools

import jax
import jax.numpy as jnp
from jax.experimental import pallas as pl
from jax.experimental.pallas import tpu as pltpu


_LANES = 128
_SMALL_N = 1024                      # below this: single fused in-VMEM kernel
_VMEM_LIMIT = 48 * 1024 * 1024       # safe on v5e/v6e (128 MiB) and v7x (64 MiB)


def _round_up(v, m):
    return ((v + m - 1) // m) * m


def _relu(v):
    return jnp.maximum(v, 0.0)


def _choose_tiling(n):
    """Returns (n_pad, tm, tk, fused)."""
    if n <= _SMALL_N:
        return _round_up(max(n, 8), 128), None, None, True
    tm = 512
    if n <= 4096:
        n_pad = _round_up(n, tm)
        tk = n_pad                      # single k step: 512 x n_pad int8 <= 2 MiB
    else:
        tk = 4096
        n_pad = _round_up(n, tk)
    return n_pad, tm, tk, False


# ---------------------------------------------------------------------------
# Fused small-N kernel: all three layers in VMEM, one pallas_call.
# ---------------------------------------------------------------------------
def _fused3_kernel(adj_ref, invdeg_ref, x_ref,
                   wp1, bp1, wl1, bl1, wr1,
                   wp2, bp2, wl2, bl2, wr2,
                   wp3, bp3, wl3, bl3, wr3,
                   out_ref):
    # adj holds 0/1 edge (multiplicity) values in int8; cast once to bf16 so the
    # MXU sees bf16 on every chip. Mean normalisation is the exact f32 1/deg
    # vector (padded rows have inv_deg == 0).
    adj = adj_ref[...].astype(jnp.bfloat16)
    inv_deg = invdeg_ref[...]                       # (n_pad, 1) f32

    def sage(h, wp, bp, wl, bl, wr):
        xp = _relu(jnp.dot(h, wp[...], preferred_element_type=jnp.float32)
                   + bp[...])
        z = jnp.dot(xp.astype(jnp.bfloat16), wl[...],
                    preferred_element_type=jnp.float32).astype(jnp.bfloat16)
        agg = jnp.dot(adj, z, preferred_element_type=jnp.float32) * inv_deg
        root = jnp.dot(h, wr[...], preferred_element_type=jnp.float32)
        return agg + root + bl[...]

    h = x_ref[...]                                  # bf16
    h = _relu(sage(h, wp1, bp1, wl1, bl1, wr1)).astype(jnp.bfloat16)
    h = _relu(sage(h, wp2, bp2, wl2, bl2, wr2)).astype(jnp.bfloat16)
    out_ref[...] = jax.nn.sigmoid(sage(h, wp3, bp3, wl3, bl3, wr3))


# ---------------------------------------------------------------------------
# Large-N path: per-layer (1) node-wise projection kernel, (2) tiled aggregation.
# ---------------------------------------------------------------------------
def _project_kernel(x_ref, wp_ref, bp_ref, wl_ref, bl_ref, wr_ref, z_ref, r_ref):
    x = x_ref[...]                                  # bf16 (tn, f_in)
    xp = _relu(jnp.dot(x, wp_ref[...], preferred_element_type=jnp.float32)
               + bp_ref[...])
    # Pre-multiply by lin_l so the O(N^2) aggregation runs at the output width.
    z_ref[...] = jnp.dot(xp.astype(jnp.bfloat16), wl_ref[...],
                         preferred_element_type=jnp.float32).astype(z_ref.dtype)
    r_ref[...] = (jnp.dot(x, wr_ref[...], preferred_element_type=jnp.float32)
                  + bl_ref[...]).astype(r_ref.dtype)


def _aggregate_kernel(adj_ref, z_ref, r_ref, invdeg_ref, out_ref, acc_ref, *,
                      activation):
    k = pl.program_id(1)

    @pl.when(k == 0)
    def _():
        acc_ref[...] = jnp.zeros_like(acc_ref)

    # int8 adj tile -> bf16 (VPU), bf16 x bf16 matmul, f32 accumulate.
    acc_ref[...] += jnp.dot(adj_ref[...].astype(jnp.bfloat16), z_ref[...],
                            preferred_element_type=jnp.float32)

    @pl.when(k == pl.num_programs(1) - 1)
    def _():
        out = acc_ref[...] * invdeg_ref[...] + r_ref[...]
        out_ref[...] = activation(out).astype(out_ref.dtype)


def _sage_layer_tiled(h, adj_i8, inv_deg, layer_params, activation, out_dtype,
                      tm, tk):
    wp, bp, wl, bl, wr = layer_params
    n_pad, f_in = h.shape
    f_out = wl.shape[1]
    tn = tm

    # (1) Per-node projection, computed once per node (hoisted out of the
    #     aggregation loop where it used to be recomputed per dst tile).
    z, r = pl.pallas_call(
        _project_kernel,
        out_shape=(jax.ShapeDtypeStruct((n_pad, f_out), jnp.bfloat16),
                   jax.ShapeDtypeStruct((n_pad, f_out), jnp.float32)),
        grid_spec=pltpu.PrefetchScalarGridSpec(
            num_scalar_prefetch=0,
            grid=(n_pad // tn,),
            in_specs=[
                pl.BlockSpec((tn, f_in), lambda i: (i, 0)),      # x tile
                pl.BlockSpec((f_in, f_in), lambda i: (0, 0)),    # wp (resident)
                pl.BlockSpec((1, f_in), lambda i: (0, 0)),       # bp
                pl.BlockSpec((f_in, f_out), lambda i: (0, 0)),   # wl
                pl.BlockSpec((1, f_out), lambda i: (0, 0)),      # bl
                pl.BlockSpec((f_in, f_out), lambda i: (0, 0)),   # wr
            ],
            out_specs=(pl.BlockSpec((tn, f_out), lambda i: (i, 0)),
                       pl.BlockSpec((tn, f_out), lambda i: (i, 0))),
        ),
        compiler_params=pltpu.CompilerParams(
            dimension_semantics=("parallel",),
            vmem_limit_bytes=_VMEM_LIMIT),
    )(h, wp, bp, wl, bl, wr)

    # (2) O(N^2) mean aggregation + root term + activation.
    kernel = functools.partial(_aggregate_kernel, activation=activation)
    return pl.pallas_call(
        kernel,
        out_shape=jax.ShapeDtypeStruct((n_pad, f_out), out_dtype),
        grid_spec=pltpu.PrefetchScalarGridSpec(
            num_scalar_prefetch=0,
            grid=(n_pad // tm, n_pad // tk),
            in_specs=[
                pl.BlockSpec((tm, tk), lambda i, k: (i, k)),      # adj (int8)
                pl.BlockSpec((tk, f_out), lambda i, k: (k, 0)),   # z (src rows)
                pl.BlockSpec((tm, f_out), lambda i, k: (i, 0)),   # r (dst rows)
                pl.BlockSpec((tm, 1), lambda i, k: (i, 0)),       # inv_deg (dst)
            ],
            out_specs=pl.BlockSpec((tm, f_out), lambda i, k: (i, 0)),
            scratch_shapes=[pltpu.VMEM((tm, f_out), jnp.float32)],
        ),
        compiler_params=pltpu.CompilerParams(
            dimension_semantics=("parallel", "arbitrary"),
            vmem_limit_bytes=_VMEM_LIMIT),
    )(adj_i8, z, r, inv_deg)


# ---------------------------------------------------------------------------
# Wrappers (preprocessing hoisted out of the per-forward path).
# ---------------------------------------------------------------------------
def build_graph(edge_index, num_nodes):
    """One-time per-graph preprocessing: padded 0/1 int8 dense adjacency
    (dst, src) and the per-dst-row f32 1/deg vector for exact mean aggregation."""
    n_pad, _, _, _ = _choose_tiling(num_nodes)
    src, dst = edge_index[0], edge_index[1]
    counts = jnp.zeros((n_pad, n_pad), jnp.int32).at[dst, src].add(1)
    deg = counts.sum(axis=1, keepdims=True).astype(jnp.float32)
    inv_deg = jnp.where(deg > 0, 1.0 / jnp.maximum(deg, 1.0), 0.0)
    return counts.astype(jnp.int8), inv_deg


def prepare_params(params):
    """Cast weights to bf16 (MXU-native), keep biases f32, and zero-pad the final
    1-wide layer out to 128 lanes so its aggregation output is lane-dense."""
    def prep(p, pad_out=False):
        wp, bp, wl, bl, wr = p
        if pad_out:
            f_out = wl.shape[1]
            wl = jnp.pad(wl, ((0, 0), (0, _LANES - f_out)))
            wr = jnp.pad(wr, ((0, 0), (0, _LANES - f_out)))
            bl = jnp.pad(bl, ((0, 0), (0, _LANES - f_out)))
        return (wp.astype(jnp.bfloat16), bp.astype(jnp.float32),
                wl.astype(jnp.bfloat16), bl.astype(jnp.float32),
                wr.astype(jnp.bfloat16))
    p1, p2, p3 = params
    return prep(p1), prep(p2), prep(p3, pad_out=True)


def sage_gnn_forward(x, adj_i8, inv_deg, prepared):
    n = x.shape[0]
    n_pad = adj_i8.shape[0]
    _, tm, tk, fused = _choose_tiling(n)
    p1, p2, p3 = prepared

    x_p = jnp.zeros((n_pad, x.shape[1]), jnp.bfloat16).at[:n, :].set(
        x.astype(jnp.bfloat16))

    if fused:
        flat = list(p1) + list(p2) + list(p3)
        out = pl.pallas_call(
            _fused3_kernel,
            out_shape=jax.ShapeDtypeStruct((n_pad, _LANES), jnp.float32),
        )(adj_i8, inv_deg, x_p, *flat)
    else:
        h = _sage_layer_tiled(x_p, adj_i8, inv_deg, p1, _relu, jnp.bfloat16,
                              tm, tk)
        h = _sage_layer_tiled(h, adj_i8, inv_deg, p2, _relu, jnp.bfloat16,
                              tm, tk)
        out = _sage_layer_tiled(h, adj_i8, inv_deg, p3, jax.nn.sigmoid,
                                jnp.float32, tm, tk)
    # Padded rows (zero adj columns / inv_deg==0) never affect real rows.
    return out[:n, :1]


# ---------------------------------------------------------------------------
# Synthetic parameter init + pure-JAX reference.
# ---------------------------------------------------------------------------
def _init_linear(key, fan_in, fan_out, bias=True):
    kw, kb = jax.random.split(key)
    bound = 1.0 / float(fan_in) ** 0.5
    w = jax.random.uniform(kw, (fan_in, fan_out), jnp.float32, -bound, bound)
    if bias:
        b = jax.random.uniform(kb, (1, fan_out), jnp.float32, -bound, bound)
        return w, b
    return w


def _init_sage_params(key, in_ch, out_ch):
    k1, k2, k3 = jax.random.split(key, 3)
    wp, bp = _init_linear(k1, in_ch, in_ch, bias=True)    # projection lin
    wl, bl = _init_linear(k2, in_ch, out_ch, bias=True)   # lin_l (neighbors)
    wr = _init_linear(k3, in_ch, out_ch, bias=False)      # lin_r (root)
    return (wp, bp, wl, bl, wr)


def _reference_forward(x, edge_index, params):
    # Pure-JAX reference mirroring the kernel's bf16 casts.
    n = x.shape[0]
    src, dst = edge_index[0], edge_index[1]
    counts = jnp.zeros((n, n), jnp.float32).at[dst, src].add(1.0)
    deg = counts.sum(axis=1, keepdims=True)
    inv_deg = jnp.where(deg > 0, 1.0 / jnp.maximum(deg, 1.0), 0.0)

    def bf(a):
        return a.astype(jnp.bfloat16).astype(jnp.float32)

    def layer(h, p):
        wp, bp, wl, bl, wr = p
        hb = bf(h)
        xp = jnp.maximum(hb @ bf(wp) + bp, 0.0)
        z = bf(bf(xp) @ bf(wl))
        agg = (counts @ z) * inv_deg
        root = hb @ bf(wr)
        return agg + root + bl

    p1, p2, p3 = params
    h = jnp.maximum(layer(x, p1), 0.0)
    h = jnp.maximum(layer(h, p2), 0.0)
    return jax.nn.sigmoid(layer(h, p3))


if __name__ == "__main__":
    key = jax.random.PRNGKey(0)
    kx, k1, k2, k3 = jax.random.split(key, 4)

    # Inputs matching the PyTorch script: 3 nodes, 3 features, 3 edges.
    x = jax.random.normal(kx, (3, 3), jnp.float32)
    edge_index = jnp.array([[0, 1, 2], [1, 0, 2]], dtype=jnp.int32)

    params = (_init_sage_params(k1, 3, 16),
              _init_sage_params(k2, 16, 16),
              _init_sage_params(k3, 16, 1))

    # Hoisted per-graph / per-model preprocessing (reused across forwards).
    adj_i8, inv_deg = build_graph(edge_index, x.shape[0])
    prepared = prepare_params(params)

    fwd = jax.jit(sage_gnn_forward)
    out = fwd(x, adj_i8, inv_deg, prepared)
    jax.block_until_ready(out)

    ref = _reference_forward(x, edge_index, params)
    assert out.shape == (3, 1), out.shape
    max_err = jnp.max(jnp.abs(out - ref))
    assert jnp.allclose(out, ref, atol=1e-2, rtol=1e-2), f"max abs err {max_err}"
    print("KERNEL_OK")
</pallas_src>

<mosaic_0001>
module attributes {stable_mosaic.version = 11 : i64} {
  func.func @_fused3_kernel(%arg0: memref<128x128xi8, #tpu.memory_space<vmem>>, %arg1: memref<128x1xf32, #tpu.memory_space<vmem>>, %arg2: memref<128x3xbf16, #tpu.memory_space<vmem>>, %arg3: memref<3x3xbf16, #tpu.memory_space<vmem>>, %arg4: memref<1x3xf32, #tpu.memory_space<vmem>>, %arg5: memref<3x16xbf16, #tpu.memory_space<vmem>>, %arg6: memref<1x16xf32, #tpu.memory_space<vmem>>, %arg7: memref<3x16xbf16, #tpu.memory_space<vmem>>, %arg8: memref<16x16xbf16, #tpu.memory_space<vmem>>, %arg9: memref<1x16xf32, #tpu.memory_space<vmem>>, %arg10: memref<16x16xbf16, #tpu.memory_space<vmem>>, %arg11: memref<1x16xf32, #tpu.memory_space<vmem>>, %arg12: memref<16x16xbf16, #tpu.memory_space<vmem>>, %arg13: memref<16x16xbf16, #tpu.memory_space<vmem>>, %arg14: memref<1x16xf32, #tpu.memory_space<vmem>>, %arg15: memref<16x128xbf16, #tpu.memory_space<vmem>>, %arg16: memref<1x128xf32, #tpu.memory_space<vmem>>, %arg17: memref<16x128xbf16, #tpu.memory_space<vmem>>, %arg18: memref<128x128xf32, #tpu.memory_space<vmem>>) attributes {dimension_semantics = [], scalar_prefetch = 0 : i64, scratch_operands = 0 : i64, tpu.core_type = #tpu.core_type<tc>} {
    %c0 = arith.constant 0 : index
    %c0_0 = arith.constant 0 : index
    %0 = vector.load %arg0[%c0, %c0_0] : memref<128x128xi8, #tpu.memory_space<vmem>>, vector<128x128xi8>
    %1 = arith.sitofp %0 : vector<128x128xi8> to vector<128x128xbf16>
    %c0_1 = arith.constant 0 : index
    %c0_2 = arith.constant 0 : index
    %2 = vector.load %arg1[%c0_1, %c0_2] : memref<128x1xf32, #tpu.memory_space<vmem>>, vector<128x1xf32>
    %c0_3 = arith.constant 0 : index
    %c0_4 = arith.constant 0 : index
    %3 = vector.load %arg2[%c0_3, %c0_4] : memref<128x3xbf16, #tpu.memory_space<vmem>>, vector<128x3xbf16>
    %c0_5 = arith.constant 0 : index
    %c0_6 = arith.constant 0 : index
    %4 = vector.load %arg3[%c0_5, %c0_6] : memref<3x3xbf16, #tpu.memory_space<vmem>>, vector<3x3xbf16>
    %cst = arith.constant dense<0.000000e+00> : vector<128x3xf32>
    %5 = tpu.matmul %3, %4, %cst {dimension_numbers = #tpu.dot_dimension_numbers<[1], [0], [0], [1], [0, 0, 1, 1], [], []>} : vector<128x3xbf16>, vector<3x3xbf16>, vector<128x3xf32> -> vector<128x3xf32>
    %c0_7 = arith.constant 0 : index
    %c0_8 = arith.constant 0 : index
    %6 = vector.load %arg4[%c0_7, %c0_8] : memref<1x3xf32, #tpu.memory_space<vmem>>, vector<1x3xf32>
    %7 = vector.broadcast %6 : vector<1x3xf32> to vector<128x3xf32>
    %8 = arith.addf %5, %7 : vector<128x3xf32>
    %cst_9 = arith.constant 0.000000e+00 : f32
    %9 = vector.broadcast %cst_9 : f32 to vector<128x3xf32>
    %10 = arith.maximumf %8, %9 : vector<128x3xf32>
    %11 = arith.truncf %10 : vector<128x3xf32> to vector<128x3xbf16>
    %c0_10 = arith.constant 0 : index
    %c0_11 = arith.constant 0 : index
    %12 = vector.load %arg5[%c0_10, %c0_11] : memref<3x16xbf16, #tpu.memory_space<vmem>>, vector<3x16xbf16>
    %cst_12 = arith.constant dense<0.000000e+00> : vector<128x16xf32>
    %13 = tpu.matmul %11, %12, %cst_12 {dimension_numbers = #tpu.dot_dimension_numbers<[1], [0], [0], [1], [0, 0, 1, 1], [], []>} : vector<128x3xbf16>, vector<3x16xbf16>, vector<128x16xf32> -> vector<128x16xf32>
    %14 = arith.truncf %13 : vector<128x16xf32> to vector<128x16xbf16>
    %cst_13 = arith.constant dense<0.000000e+00> : vector<128x16xf32>
    %15 = tpu.matmul %1, %14, %cst_13 {dimension_numbers = #tpu.dot_dimension_numbers<[1], [0], [0], [1], [0, 0, 1, 1], [], []>} : vector<128x128xbf16>, vector<128x16xbf16>, vector<128x16xf32> -> vector<128x16xf32>
    %16 = vector.broadcast %2 : vector<128x1xf32> to vector<128x16xf32>
    %17 = arith.mulf %15, %16 : vector<128x16xf32>
    %c0_14 = arith.constant 0 : index
    %c0_15 = arith.constant 0 : index
    %18 = vector.load %arg7[%c0_14, %c0_15] : memref<3x16xbf16, #tpu.memory_space<vmem>>, vector<3x16xbf16>
    %cst_16 = arith.constant dense<0.000000e+00> : vector<128x16xf32>
    %19 = tpu.matmul %3, %18, %cst_16 {dimension_numbers = #tpu.dot_dimension_numbers<[1], [0], [0], [1], [0, 0, 1, 1], [], []>} : vector<128x3xbf16>, vector<3x16xbf16>, vector<128x16xf32> -> vector<128x16xf32>
    %20 = arith.addf %17, %19 : vector<128x16xf32>
    %c0_17 = arith.constant 0 : index
    %c0_18 = arith.constant 0 : index
    %21 = vector.load %arg6[%c0_17, %c0_18] : memref<1x16xf32, #tpu.memory_space<vmem>>, vector<1x16xf32>
    %22 = vector.broadcast %21 : vector<1x16xf32> to vector<128x16xf32>
    %23 = arith.addf %20, %22 : vector<128x16xf32>
    %cst_19 = arith.constant 0.000000e+00 : f32
    %24 = vector.broadcast %cst_19 : f32 to vector<128x16xf32>
    %25 = arith.maximumf %23, %24 : vector<128x16xf32>
    %26 = arith.truncf %25 : vector<128x16xf32> to vector<128x16xbf16>
    %c0_20 = arith.constant 0 : index
    %c0_21 = arith.constant 0 : index
    %27 = vector.load %arg8[%c0_20, %c0_21] : memref<16x16xbf16, #tpu.memory_space<vmem>>, vector<16x16xbf16>
    %cst_22 = arith.constant dense<0.000000e+00> : vector<128x16xf32>
    %28 = tpu.matmul %26, %27, %cst_22 {dimension_numbers = #tpu.dot_dimension_numbers<[1], [0], [0], [1], [0, 0, 1, 1], [], []>} : vector<128x16xbf16>, vector<16x16xbf16>, vector<128x16xf32> -> vector<128x16xf32>
    %c0_23 = arith.constant 0 : index
    %c0_24 = arith.constant 0 : index
    %29 = vector.load %arg9[%c0_23, %c0_24] : memref<1x16xf32, #tpu.memory_space<vmem>>, vector<1x16xf32>
    %30 = vector.broadcast %29 : vector<1x16xf32> to vector<128x16xf32>
    %31 = arith.addf %28, %30 : vector<128x16xf32>
    %cst_25 = arith.constant 0.000000e+00 : f32
    %32 = vector.broadcast %cst_25 : f32 to vector<128x16xf32>
    %33 = arith.maximumf %31, %32 : vector<128x16xf32>
    %34 = arith.truncf %33 : vector<128x16xf32> to vector<128x16xbf16>
    %c0_26 = arith.constant 0 : index
    %c0_27 = arith.constant 0 : index
    %35 = vector.load %arg10[%c0_26, %c0_27] : memref<16x16xbf16, #tpu.memory_space<vmem>>, vector<16x16xbf16>
    %cst_28 = arith.constant dense<0.000000e+00> : vector<128x16xf32>
    %36 = tpu.matmul %34, %35, %cst_28 {dimension_numbers = #tpu.dot_dimension_numbers<[1], [0], [0], [1], [0, 0, 1, 1], [], []>} : vector<128x16xbf16>, vector<16x16xbf16>, vector<128x16xf32> -> vector<128x16xf32>
    %37 = arith.truncf %36 : vector<128x16xf32> to vector<128x16xbf16>
    %cst_29 = arith.constant dense<0.000000e+00> : vector<128x16xf32>
    %38 = tpu.matmul %1, %37, %cst_29 {dimension_numbers = #tpu.dot_dimension_numbers<[1], [0], [0], [1], [0, 0, 1, 1], [], []>} : vector<128x128xbf16>, vector<128x16xbf16>, vector<128x16xf32> -> vector<128x16xf32>
    %39 = vector.broadcast %2 : vector<128x1xf32> to vector<128x16xf32>
    %40 = arith.mulf %38, %39 : vector<128x16xf32>
    %c0_30 = arith.constant 0 : index
    %c0_31 = arith.constant 0 : index
    %41 = vector.load %arg12[%c0_30, %c0_31] : memref<16x16xbf16, #tpu.memory_space<vmem>>, vector<16x16xbf16>
    %cst_32 = arith.constant dense<0.000000e+00> : vector<128x16xf32>
    %42 = tpu.matmul %26, %41, %cst_32 {dimension_numbers = #tpu.dot_dimension_numbers<[1], [0], [0], [1], [0, 0, 1, 1], [], []>} : vector<128x16xbf16>, vector<16x16xbf16>, vector<128x16xf32> -> vector<128x16xf32>
    %43 = arith.addf %40, %42 : vector<128x16xf32>
    %c0_33 = arith.constant 0 : index
    %c0_34 = arith.constant 0 : index
    %44 = vector.load %arg11[%c0_33, %c0_34] : memref<1x16xf32, #tpu.memory_space<vmem>>, vector<1x16xf32>
    %45 = vector.broadcast %44 : vector<1x16xf32> to vector<128x16xf32>
    %46 = arith.addf %43, %45 : vector<128x16xf32>
    %cst_35 = arith.constant 0.000000e+00 : f32
    %47 = vector.broadcast %cst_35 : f32 to vector<128x16xf32>
    %48 = arith.maximumf %46, %47 : vector<128x16xf32>
    %49 = arith.truncf %48 : vector<128x16xf32> to vector<128x16xbf16>
    %c0_36 = arith.constant 0 : index
    %c0_37 = arith.constant 0 : index
    %50 = vector.load %arg13[%c0_36, %c0_37] : memref<16x16xbf16, #tpu.memory_space<vmem>>, vector<16x16xbf16>
    %cst_38 = arith.constant dense<0.000000e+00> : vector<128x16xf32>
    %51 = tpu.matmul %49, %50, %cst_38 {dimension_numbers = #tpu.dot_dimension_numbers<[1], [0], [0], [1], [0, 0, 1, 1], [], []>} : vector<128x16xbf16>, vector<16x16xbf16>, vector<128x16xf32> -> vector<128x16xf32>
    %c0_39 = arith.constant 0 : index
    %c0_40 = arith.constant 0 : index
    %52 = vector.load %arg14[%c0_39, %c0_40] : memref<1x16xf32, #tpu.memory_space<vmem>>, vector<1x16xf32>
    %53 = vector.broadcast %52 : vector<1x16xf32> to vector<128x16xf32>
    %54 = arith.addf %51, %53 : vector<128x16xf32>
    %cst_41 = arith.constant 0.000000e+00 : f32
    %55 = vector.broadcast %cst_41 : f32 to vector<128x16xf32>
    %56 = arith.maximumf %54, %55 : vector<128x16xf32>
    %57 = arith.truncf %56 : vector<128x16xf32> to vector<128x16xbf16>
    %c0_42 = arith.constant 0 : index
    %c0_43 = arith.constant 0 : index
    %58 = vector.load %arg15[%c0_42, %c0_43] : memref<16x128xbf16, #tpu.memory_space<vmem>>, vector<16x128xbf16>
    %cst_44 = arith.constant dense<0.000000e+00> : vector<128x128xf32>
    %59 = tpu.matmul %57, %58, %cst_44 {dimension_numbers = #tpu.dot_dimension_numbers<[1], [0], [0], [1], [0, 0, 1, 1], [], []>} : vector<128x16xbf16>, vector<16x128xbf16>, vector<128x128xf32> -> vector<128x128xf32>
    %60 = arith.truncf %59 : vector<128x128xf32> to vector<128x128xbf16>
    %cst_45 = arith.constant dense<0.000000e+00> : vector<128x128xf32>
    %61 = tpu.matmul %1, %60, %cst_45 {dimension_numbers = #tpu.dot_dimension_numbers<[1], [0], [0], [1], [0, 0, 1, 1], [], []>} : vector<128x128xbf16>, vector<128x128xbf16>, vector<128x128xf32> -> vector<128x128xf32>
    %62 = vector.broadcast %2 : vector<128x1xf32> to vector<128x128xf32>
    %63 = arith.mulf %61, %62 : vector<128x128xf32>
    %c0_46 = arith.constant 0 : index
    %c0_47 = arith.constant 0 : index
    %64 = vector.load %arg17[%c0_46, %c0_47] : memref<16x128xbf16, #tpu.memory_space<vmem>>, vector<16x128xbf16>
    %cst_48 = arith.constant dense<0.000000e+00> : vector<128x128xf32>
    %65 = tpu.matmul %49, %64, %cst_48 {dimension_numbers = #tpu.dot_dimension_numbers<[1], [0], [0], [1], [0, 0, 1, 1], [], []>} : vector<128x16xbf16>, vector<16x128xbf16>, vector<128x128xf32> -> vector<128x128xf32>
    %66 = arith.addf %63, %65 : vector<128x128xf32>
    %c0_49 = arith.constant 0 : index
    %c0_50 = arith.constant 0 : index
    %67 = vector.load %arg16[%c0_49, %c0_50] : memref<1x128xf32, #tpu.memory_space<vmem>>, vector<1x128xf32>
    %68 = vector.broadcast %67 : vector<1x128xf32> to vector<128x128xf32>
    %69 = arith.addf %66, %68 : vector<128x128xf32>
    %70 = arith.negf %69 : vector<128x128xf32>
    %71 = math.exp %70 : vector<128x128xf32>
    %cst_51 = arith.constant 1.000000e+00 : f32
    %72 = vector.broadcast %cst_51 : f32 to vector<128x128xf32>
    %73 = arith.addf %72, %71 : vector<128x128xf32>
    %74 = arith.divf %72, %73 : vector<128x128xf32>
    %c0_52 = arith.constant 0 : index
    %c0_53 = arith.constant 0 : index
    %75 = vector.load %arg18[%c0_52, %c0_53] : memref<128x128xf32, #tpu.memory_space<vmem>>, vector<128x128xf32>
    tpu.vector_store %arg18[%c0_52, %c0_53], %74 {strides = array<i32>} : memref<128x128xf32, #tpu.memory_space<vmem>>, vector<128x128xf32>,
    return
  }
}

</mosaic_0001>

<llo_original>
// kernel: sage_gnn_forward.1
$region0: #{sage_gnn_forward.1}
  #allocation0 [shape = 'u32[]', space=smem, size = 0x4, offset = 0x4, fixed_abs, tag = 'smem constant byte address 0x4 - core index']
  #allocation1 [shape = 'u32[144,128]{1,0:T(1,128)}', space=vmem, size = 0x12000, scoped, tag = 'internal scratch']
  %s0 = inlined_call_operand.vmem [shape: s8[128,128], index: 0, kind: input, shape index: {}]
  %s1 = inlined_call_operand.vmem [shape: f32[128,1], index: 1, kind: input, shape index: {}]
  %s2 = inlined_call_operand.vmem [shape: bf16[128,3], index: 2, kind: input, shape index: {}]
  %s3 = inlined_call_operand.vmem [shape: bf16[3,3], index: 3, kind: input, shape index: {}]
  %s4 = inlined_call_operand.vmem [shape: f32[1,3], index: 4, kind: input, shape index: {}]
  %s5 = inlined_call_operand.vmem [shape: bf16[3,16], index: 5, kind: input, shape index: {}]
  %s6 = inlined_call_operand.vmem [shape: f32[1,16], index: 6, kind: input, shape index: {}]
  %s7 = inlined_call_operand.vmem [shape: bf16[3,16], index: 7, kind: input, shape index: {}]
  %s8 = inlined_call_operand.vmem [shape: bf16[16,16], index: 8, kind: input, shape index: {}]
  %s9 = inlined_call_operand.vmem [shape: f32[1,16], index: 9, kind: input, shape index: {}]
  %s10 = inlined_call_operand.vmem [shape: bf16[16,16], index: 10, kind: input, shape index: {}]
  %s11 = inlined_call_operand.vmem [shape: f32[1,16], index: 11, kind: input, shape index: {}]
  %s12 = inlined_call_operand.vmem [shape: bf16[16,16], index: 12, kind: input, shape index: {}]
  %s13 = inlined_call_operand.vmem [shape: bf16[16,16], index: 13, kind: input, shape index: {}]
  %s14 = inlined_call_operand.vmem [shape: f32[1,16], index: 14, kind: input, shape index: {}]
  %s15 = inlined_call_operand.vmem [shape: bf16[16,128], index: 15, kind: input, shape index: {}]
  %s16 = inlined_call_operand.vmem [shape: f32[1,128], index: 16, kind: input, shape index: {}]
  %s17 = inlined_call_operand.vmem [shape: bf16[16,128], index: 17, kind: input, shape index: {}]
  %s18 = inlined_call_operand.vmem [shape: f32[128,128], index: 18, kind: output, shape index: {}]
  %s19 = sld [smem:[#allocation0]]
  $region82: #{sage_gnn_forward.1} parent=0
    _
  %s21 = ssub.s32 1, %s19
  %s22 = scalar_select 0, %s21, %s19
  // Predicated region
  $region2: #{sage_gnn_forward.1} parent=0 // pred_check
    _
  $region3: #{sage_gnn_forward.1} parent=0 // pred_check_branch
    %24 = sbr.rel (0) target = $region5
  $region4: #{sage_gnn_forward.1} parent=0 // pred_region
    _
  $region5: #{sage_gnn_forward.1} parent=0 // pred_fallthru
    _
  // Predicated region
  $region6: #{sage_gnn_forward.1} parent=0 // pred_check
    _
  $region7: #{sage_gnn_forward.1} parent=0 // pred_check_branch
    %26 = sbr.rel (0) target = $region9
  $region8: #{sage_gnn_forward.1} parent=0 // pred_region
    _
  $region9: #{sage_gnn_forward.1} parent=0 // pred_fallthru
    _
  // Predicated region
  $region10: #{sage_gnn_forward.1} parent=0 // pred_check
    _
  $region11: #{sage_gnn_forward.1} parent=0 // pred_check_branch
    %28 = sbr.rel (0) target = $region13
  $region12: #{sage_gnn_forward.1} parent=0 // pred_region
    _
  $region13: #{sage_gnn_forward.1} parent=0 // pred_fallthru
    _
  // Predicated region
  $region14: #{sage_gnn_forward.1} parent=0 // pred_check
    _
  $region15: #{sage_gnn_forward.1} parent=0 // pred_check_branch
    %30 = sbr.rel (0) target = $region17
  $region16: #{sage_gnn_forward.1} parent=0 // pred_region
    _
  $region17: #{sage_gnn_forward.1} parent=0 // pred_fallthru
    _
  // Predicated region
  $region18: #{sage_gnn_forward.1} parent=0 // pred_check
    _
  $region19: #{sage_gnn_forward.1} parent=0 // pred_check_branch
    %32 = sbr.rel (0) target = $region21
  $region20: #{sage_gnn_forward.1} parent=0 // pred_region
    _
  $region21: #{sage_gnn_forward.1} parent=0 // pred_fallthru
    _
  // Predicated region
  $region22: #{sage_gnn_forward.1} parent=0 // pred_check
    _
  $region23: #{sage_gnn_forward.1} parent=0 // pred_check_branch
    %34 = sbr.rel (0) target = $region25
  $region24: #{sage_gnn_forward.1} parent=0 // pred_region
    _
  $region25: #{sage_gnn_forward.1} parent=0 // pred_fallthru
    _
  // Predicated region
  $region26: #{sage_gnn_forward.1} parent=0 // pred_check
    _
  $region27: #{sage_gnn_forward.1} parent=0 // pred_check_branch
    %36 = sbr.rel (0) target = $region29
  $region28: #{sage_gnn_forward.1} parent=0 // pred_region
    _
  $region29: #{sage_gnn_forward.1} parent=0 // pred_fallthru
    _
  // Predicated region
  $region30: #{sage_gnn_forward.1} parent=0 // pred_check
    _
  $region31: #{sage_gnn_forward.1} parent=0 // pred_check_branch
    %38 = sbr.rel (0) target = $region33
  $region32: #{sage_gnn_forward.1} parent=0 // pred_region
    _
  $region33: #{sage_gnn_forward.1} parent=0 // pred_fallthru
    _
  // Predicated region
  $region34: #{sage_gnn_forward.1} parent=0 // pred_check
    _
  $region35: #{sage_gnn_forward.1} parent=0 // pred_check_branch
    %40 = sbr.rel (0) target = $region37
  $region36: #{sage_gnn_forward.1} parent=0 // pred_region
    _
  $region37: #{sage_gnn_forward.1} parent=0 // pred_fallthru
    _
  // Predicated region
  $region38: #{sage_gnn_forward.1} parent=0 // pred_check
    _
  $region39: #{sage_gnn_forward.1} parent=0 // pred_check_branch
    %42 = sbr.rel (0) target = $region41
  $region40: #{sage_gnn_forward.1} parent=0 // pred_region
    _
  $region41: #{sage_gnn_forward.1} parent=0 // pred_fallthru
    _
  // Predicated region
  $region42: #{sage_gnn_forward.1} parent=0 // pred_check
    _
  $region43: #{sage_gnn_forward.1} parent=0 // pred_check_branch
    %44 = sbr.rel (0) target = $region45
  $region44: #{sage_gnn_forward.1} parent=0 // pred_region
    _
  $region45: #{sage_gnn_forward.1} parent=0 // pred_fallthru
    _
  // Predicated region
  $region46: #{sage_gnn_forward.1} parent=0 // pred_check
    _
  $region47: #{sage_gnn_forward.1} parent=0 // pred_check_branch
    %46 = sbr.rel (0) target = $region49
  $region48: #{sage_gnn_forward.1} parent=0 // pred_region
    _
  $region49: #{sage_gnn_forward.1} parent=0 // pred_fallthru
    _
  // Predicated region
  $region50: #{sage_gnn_forward.1} parent=0 // pred_check
    _
  $region51: #{sage_gnn_forward.1} parent=0 // pred_check_branch
    %48 = sbr.rel (0) target = $region53
  $region52: #{sage_gnn_forward.1} parent=0 // pred_region
    _
  $region53: #{sage_gnn_forward.1} parent=0 // pred_fallthru
    _
  // Predicated region
  $region54: #{sage_gnn_forward.1} parent=0 // pred_check
    _
  $region55: #{sage_gnn_forward.1} parent=0 // pred_check_branch
    %50 = sbr.rel (0) target = $region57
  $region56: #{sage_gnn_forward.1} parent=0 // pred_region
    _
  $region57: #{sage_gnn_forward.1} parent=0 // pred_fallthru
    _
  // Predicated region
  $region58: #{sage_gnn_forward.1} parent=0 // pred_check
    _
  $region59: #{sage_gnn_forward.1} parent=0 // pred_check_branch
    %52 = sbr.rel (0) target = $region61
  $region60: #{sage_gnn_forward.1} parent=0 // pred_region
    _
  $region61: #{sage_gnn_forward.1} parent=0 // pred_fallthru
    _
  // Predicated region
  $region62: #{sage_gnn_forward.1} parent=0 // pred_check
    _
  $region63: #{sage_gnn_forward.1} parent=0 // pred_check_branch
    %54 = sbr.rel (0) target = $region65
  $region64: #{sage_gnn_forward.1} parent=0 // pred_region
    _
  $region65: #{sage_gnn_forward.1} parent=0 // pred_fallthru
    _
  // Predicated region
  $region66: #{sage_gnn_forward.1} parent=0 // pred_check
    _
  $region67: #{sage_gnn_forward.1} parent=0 // pred_check_branch
    %56 = sbr.rel (0) target = $region69
  $region68: #{sage_gnn_forward.1} parent=0 // pred_region
    _
  $region69: #{sage_gnn_forward.1} parent=0 // pred_fallthru
    _
  // Predicated region
  $region70: #{sage_gnn_forward.1} parent=0 // pred_check
    _
  $region71: #{sage_gnn_forward.1} parent=0 // pred_check_branch
    %58 = sbr.rel (0) target = $region73
  $region72: #{sage_gnn_forward.1} parent=0 // pred_region
    _
  $region73: #{sage_gnn_forward.1} parent=0 // pred_fallthru
    _
  %v60 = vld [vmem:[%s0] sm:$0xff]
  %v61 = vld [vmem:[%s0 + $0x8] sm:$0xff]
  %v62 = vld [vmem:[%s0 + $0x10] sm:$0xff]
  %v63 = vld [vmem:[%s0 + $0x18] sm:$0xff]
  %v64 = vunpack.c.l.s8.bf16 %v60
  %v65 = vunpack.c.h.s8.bf16 %v60
  %v66 = vunpack.c.l.s8.bf16 %v61
  %v67 = vunpack.c.h.s8.bf16 %v61
  %v68 = vunpack.c.l.s8.bf16 %v62
  %v69 = vunpack.c.h.s8.bf16 %v62
  %v70 = vunpack.c.l.s8.bf16 %v63
  %v71 = vunpack.c.h.s8.bf16 %v63
  %v72 = vld [vmem:[%s1] sm:$0xff]
  %v73 = vld [vmem:[%s1 + $0x8] sm:$0xff]
  %v74 = vld [vmem:[%s1 + $0x10] sm:$0xff]
  %v75 = vld [vmem:[%s1 + $0x18] sm:$0xff]
  %v76 = vld [vmem:[%s1 + $0x20] sm:$0xff]
  %v77 = vld [vmem:[%s1 + $0x28] sm:$0xff]
  %v78 = vld [vmem:[%s1 + $0x30] sm:$0xff]
  %v79 = vld [vmem:[%s1 + $0x38] sm:$0xff]
  %v80 = vld [vmem:[%s1 + $0x40] sm:$0xff]
  %v81 = vld [vmem:[%s1 + $0x48] sm:$0xff]
  %v82 = vld [vmem:[%s1 + $0x50] sm:$0xff]
  %v83 = vld [vmem:[%s1 + $0x58] sm:$0xff]
  %v84 = vld [vmem:[%s1 + $0x60] sm:$0xff]
  %v85 = vld [vmem:[%s1 + $0x68] sm:$0xff]
  %v86 = vld [vmem:[%s1 + $0x70] sm:$0xff]
  %v87 = vld [vmem:[%s1 + $0x78] sm:$0xff]
  %v88 = vld [vmem:[%s2] sm:$0xf]
  %v89 = vld [vmem:[%s2 + $0x4] sm:$0xf]
  %v90 = vld [vmem:[%s2 + $0x8] sm:$0xf]
  %v91 = vld [vmem:[%s2 + $0xc] sm:$0xf]
  %v92 = vld [vmem:[%s2 + $0x10] sm:$0xf]
  %v93 = vld [vmem:[%s2 + $0x14] sm:$0xf]
  %v94 = vld [vmem:[%s2 + $0x18] sm:$0xf]
  %v95 = vld [vmem:[%s2 + $0x1c] sm:$0xf]
  %v96 = vld [vmem:[%s2 + $0x20] sm:$0xf]
  %v97 = vld [vmem:[%s2 + $0x24] sm:$0xf]
  %v98 = vld [vmem:[%s2 + $0x28] sm:$0xf]
  %v99 = vld [vmem:[%s2 + $0x2c] sm:$0xf]
  %v100 = vld [vmem:[%s2 + $0x30] sm:$0xf]
  %v101 = vld [vmem:[%s2 + $0x34] sm:$0xf]
  %v102 = vld [vmem:[%s2 + $0x38] sm:$0xf]
  %v103 = vld [vmem:[%s2 + $0x3c] sm:$0xf]
  %v104 = vld [vmem:[%s3] sm:$0x3]
  %v105 = vld [vmem:[%s4] sm:$0x1]
  %v107 = vlaneseq
  %v108 = vshrl.u32 %v107, 7
  %v109 = vsub.s32 0, %v108
  %v110 = vrot.slane %v105, %v109
  %v128 = vunpack.c.l.b16 %v88
  %v129 = vunpack.c.l.b16 %v89
  %v130 = vunpack.c.l.b16 %v90
  %v131 = vunpack.c.l.b16 %v91
  %v132 = vunpack.c.l.b16 %v92
  %v133 = vunpack.c.l.b16 %v93
  %v134 = vunpack.c.l.b16 %v94
  %v135 = vunpack.c.l.b16 %v95
  %v136 = vunpack.c.l.b16 %v96
  %v137 = vunpack.c.l.b16 %v97
  %v138 = vunpack.c.l.b16 %v98
  %v139 = vunpack.c.l.b16 %v99
  %v140 = vunpack.c.l.b16 %v100
  %v141 = vunpack.c.l.b16 %v101
  %v142 = vunpack.c.l.b16 %v102
  %v143 = vunpack.c.l.b16 %v103
  %v144 = vpack.c.b16 %v129, %v128
  %v145 = vpack.c.b16 %v131, %v130
  %v146 = vpack.c.b16 %v133, %v132
  %v147 = vpack.c.b16 %v135, %v134
  %v148 = vpack.c.b16 %v137, %v136
  %v149 = vpack.c.b16 %v139, %v138
  %v150 = vpack.c.b16 %v141, %v140
  %v151 = vpack.c.b16 %v143, %v142
  %vm152 = vcmask 23552
  %v154 = vsel %vm152, %v144, 0
  %v157 = vsel %vm152, %v145, 0
  %v160 = vsel %vm152, %v146, 0
  %v163 = vsel %vm152, %v147, 0
  %v166 = vsel %vm152, %v148, 0
  %v169 = vsel %vm152, %v149, 0
  %v172 = vsel %vm152, %v150, 0
  %v175 = vsel %vm152, %v151, 0
  %vm177 = vcmask 1040384
  %vm178 = vcmask 1041408
  %v179 = vsel %vm177, 4294967295, 65535
  %v180 = vsel %vm178, %v179, 0
  %v182 = vand.u32 %v104, %v180
  %184 = vmatprep.subr.bf16.mxu0 0
  %185 = vmatpush1.bf16.msra.mxu0 0
  %186 = vmatprep.subr.bf16.mxu0 0
  %187 = vmatpush1.bf16.msra.mxu0 0
  %188 = vmatprep.subr.bf16.mxu0 0
  %189 = vmatpush1.bf16.msra.mxu0 0
  %190 = vmatprep.subr.bf16.mxu0 0
  %191 = vmatpush1.bf16.msra.mxu0 0
  %192 = vmatprep.subr.bf16.mxu0 0
  %193 = vmatpush1.bf16.msra.mxu0 0
  %194 = vmatprep.subr.bf16.mxu0 0
  %195 = vmatpush1.bf16.msra.mxu0 0
  %196 = vmatprep.subr.bf16.mxu0 0
  %197 = vmatpush1.bf16.msra.mxu0 0
  %198 = vmatprep.subr.bf16.mxu0 0
  %199 = vmatpush1.bf16.msra.mxu0 %v182
  %200 = vmatprep.subr.bf16.mxu0 0
  %201 = vmatpush2.bf16.msra.mxu0 0
  %202 = vmatprep.subr.bf16.mxu0 0
  %203 = vmatpush2.bf16.msra.mxu0 0
  %204 = vmatprep.subr.bf16.mxu0 0
  %205 = vmatpush2.bf16.msra.mxu0 0
  %206 = vmatprep.subr.bf16.mxu0 0
  %207 = vmatpush2.bf16.msra.mxu0 0
  %208 = vmatprep.subr.bf16.mxu0 0
  %209 = vmatpush2.bf16.msra.mxu0 0
  %210 = vmatprep.subr.bf16.mxu0 0
  %211 = vmatpush2.bf16.msra.mxu0 0
  %212 = vmatprep.subr.bf16.mxu0 0
  %213 = vmatpush2.bf16.msra.mxu0 0
  %214 = vmatprep.subr.bf16.mxu0 0
  %215 = vmatpush2.bf16.msra.mxu0 0
  %216 = vmatprep.mubr.bf16.mxu0 0
  %217 = vmatmul.mubr.bf16.gmra.mxu0 %v154
  %v218 = vpop.f32.mrf.mxu0
  %v219 = vadd.f32 %v110, %v218
  %v220 = vpop.f32.mrf.mxu0
  %v221 = vpop.f32.mrf.mxu0
  %v222 = vadd.f32 %v110, %v221
  %v223 = vpop.f32.mrf.mxu0
  %224 = vmatprep.mubr.bf16.mxu0 0
  %225 = vmatmul.mubr.bf16.gmra.mxu0 %v157
  %v226 = vpop.f32.mrf.mxu0
  %v227 = vadd.f32 %v110, %v226
  %v228 = vpop.f32.mrf.mxu0
  %v229 = vpop.f32.mrf.mxu0
  %v230 = vadd.f32 %v110, %v229
  %v231 = vpop.f32.mrf.mxu0
  %232 = vmatprep.mubr.bf16.mxu0 0
  %233 = vmatmul.mubr.bf16.gmra.mxu0 %v160
  %v234 = vpop.f32.mrf.mxu0
  %v235 = vadd.f32 %v110, %v234
  %v236 = vpop.f32.mrf.mxu0
  %v237 = vpop.f32.mrf.mxu0
  %v238 = vadd.f32 %v110, %v237
  %v239 = vpop.f32.mrf.mxu0
  %240 = vmatprep.mubr.bf16.mxu0 0
  %241 = vmatmul.mubr.bf16.gmra.mxu0 %v163
  %v242 = vpop.f32.mrf.mxu0
  %v243 = vadd.f32 %v110, %v242
  %v244 = vpop.f32.mrf.mxu0
  %v245 = vpop.f32.mrf.mxu0
  %v246 = vadd.f32 %v110, %v245
  %v247 = vpop.f32.mrf.mxu0
  %248 = vmatprep.mubr.bf16.mxu0 0
  %249 = vmatmul.mubr.bf16.gmra.mxu0 %v166
  %v250 = vpop.f32.mrf.mxu0
  %v251 = vadd.f32 %v110, %v250
  %v252 = vpop.f32.mrf.mxu0
  %v253 = vpop.f32.mrf.mxu0
  %v254 = vadd.f32 %v110, %v253
  %v255 = vpop.f32.mrf.mxu0
  %256 = vmatprep.mubr.bf16.mxu0 0
  %257 = vmatmul.mubr.bf16.gmra.mxu0 %v169
  %v258 = vpop.f32.mrf.mxu0
  %v259 = vadd.f32 %v110, %v258
  %v260 = vpop.f32.mrf.mxu0
  %v261 = vpop.f32.mrf.mxu0
  %v262 = vadd.f32 %v110, %v261
  %v263 = vpop.f32.mrf.mxu0
  %264 = vmatprep.mubr.bf16.mxu0 0
  %265 = vmatmul.mubr.bf16.gmra.mxu0 %v172
  %v266 = vpop.f32.mrf.mxu0
  %v267 = vadd.f32 %v110, %v266
  %v268 = vpop.f32.mrf.mxu0
  %v269 = vpop.f32.mrf.mxu0
  %v270 = vadd.f32 %v110, %v269
  %v271 = vpop.f32.mrf.mxu0
  %272 = vmatprep.mubr.bf16.mxu0 0
  %273 = vmatmul.mubr.bf16.gmra.mxu0 %v175
  %v274 = vpop.f32.mrf.mxu0
  %v275 = vadd.f32 %v110, %v274
  %v276 = vpop.f32.mrf.mxu0
  %v277 = vpop.f32.mrf.mxu0
  %v278 = vadd.f32 %v110, %v277
  %v279 = vpop.f32.mrf.mxu0
  %280 = vdwg.mxu0
  %v281 = vmax.f32 %v219, 0.0
  %v282 = vmax.f32 %v222, 0.0
  %v283 = vmax.f32 %v227, 0.0
  %v284 = vmax.f32 %v230, 0.0
  %v285 = vmax.f32 %v235, 0.0
  %v286 = vmax.f32 %v238, 0.0
  %v287 = vmax.f32 %v243, 0.0
  %v288 = vmax.f32 %v246, 0.0
  %v289 = vmax.f32 %v251, 0.0
  %v290 = vmax.f32 %v254, 0.0
  %v291 = vmax.f32 %v259, 0.0
  %v292 = vmax.f32 %v262, 0.0
  %v293 = vmax.f32 %v267, 0.0
  %v294 = vmax.f32 %v270, 0.0
  %v295 = vmax.f32 %v275, 0.0
  %v296 = vmax.f32 %v278, 0.0
  %v297 = vpack.c.bf16 %v282, %v281
  %v298 = vpack.c.bf16 %v284, %v283
  %v299 = vpack.c.bf16 %v286, %v285
  %v300 = vpack.c.bf16 %v288, %v287
  %v301 = vpack.c.bf16 %v290, %v289
  %v302 = vpack.c.bf16 %v292, %v291
  %v303 = vpack.c.bf16 %v294, %v293
  %v304 = vpack.c.bf16 %v296, %v295
  %v305 = vld [vmem:[%s5] sm:$0x3]
  %v307 = vsel %vm152, %v297, 0
  %v310 = vsel %vm152, %v298, 0
  %v313 = vsel %vm152, %v299, 0
  %v316 = vsel %vm152, %v300, 0
  %v319 = vsel %vm152, %v301, 0
  %v322 = vsel %vm152, %v302, 0
  %v325 = vsel %vm152, %v303, 0
  %v328 = vsel %vm152, %v304, 0
  %v331 = vand.u32 %v305, %v180
  %333 = vmatprep.subr.bf16.mxu0 0
  %334 = vmatpush1.bf16.msra.mxu0 0
  %335 = vmatprep.subr.bf16.mxu0 0
  %336 = vmatpush1.bf16.msra.mxu0 0
  %337 = vmatprep.subr.bf16.mxu0 0
  %338 = vmatpush1.bf16.msra.mxu0 0
  %339 = vmatprep.subr.bf16.mxu0 0
  %340 = vmatpush1.bf16.msra.mxu0 0
  %341 = vmatprep.subr.bf16.mxu0 0
  %342 = vmatpush1.bf16.msra.mxu0 0
  %343 = vmatprep.subr.bf16.mxu0 0
  %344 = vmatpush1.bf16.msra.mxu0 0
  %345 = vmatprep.subr.bf16.mxu0 0
  %346 = vmatpush1.bf16.msra.mxu0 0
  %347 = vmatprep.subr.bf16.mxu0 0
  %348 = vmatpush1.bf16.msra.mxu0 %v331
  %349 = vmatprep.subr.bf16.mxu0 0
  %350 = vmatpush2.bf16.msra.mxu0 0
  %351 = vmatprep.subr.bf16.mxu0 0
  %352 = vmatpush2.bf16.msra.mxu0 0
  %353 = vmatprep.subr.bf16.mxu0 0
  %354 = vmatpush2.bf16.msra.mxu0 0
  %355 = vmatprep.subr.bf16.mxu0 0
  %356 = vmatpush2.bf16.msra.mxu0 0
  %357 = vmatprep.subr.bf16.mxu0 0
  %358 = vmatpush2.bf16.msra.mxu0 0
  %359 = vmatprep.subr.bf16.mxu0 0
  %360 = vmatpush2.bf16.msra.mxu0 0
  %361 = vmatprep.subr.bf16.mxu0 0
  %362 = vmatpush2.bf16.msra.mxu0 0
  %363 = vmatprep.subr.bf16.mxu0 0
  %364 = vmatpush2.bf16.msra.mxu0 0
  %365 = vmatprep.mubr.bf16.mxu0 0
  %366 = vmatmul.mubr.bf16.gmra.mxu0 %v307
  %v367 = vpop.f32.mrf.mxu0
  %v368 = vadd.f32 0.0, %v367
  %v369 = vpop.f32.mrf.mxu0
  %v370 = vpop.f32.mrf.mxu0
  %v371 = vadd.f32 0.0, %v370
  %v372 = vpop.f32.mrf.mxu0
  %373 = vmatprep.mubr.bf16.mxu0 0
  %374 = vmatmul.mubr.bf16.gmra.mxu0 %v310
  %v375 = vpop.f32.mrf.mxu0
  %v376 = vadd.f32 0.0, %v375
  %v377 = vpop.f32.mrf.mxu0
  %v378 = vpop.f32.mrf.mxu0
  %v379 = vadd.f32 0.0, %v378
  %v380 = vpop.f32.mrf.mxu0
  %381 = vmatprep.mubr.bf16.mxu0 0
  %382 = vmatmul.mubr.bf16.gmra.mxu0 %v313
  %v383 = vpop.f32.mrf.mxu0
  %v384 = vadd.f32 0.0, %v383
  %v385 = vpop.f32.mrf.mxu0
  %v386 = vpop.f32.mrf.mxu0
  %v387 = vadd.f32 0.0, %v386
  %v388 = vpop.f32.mrf.mxu0
  %389 = vmatprep.mubr.bf16.mxu0 0
  %390 = vmatmul.mubr.bf16.gmra.mxu0 %v316
  %v391 = vpop.f32.mrf.mxu0
  %v392 = vadd.f32 0.0, %v391
  %v393 = vpop.f32.mrf.mxu0
  %v394 = vpop.f32.mrf.mxu0
  %v395 = vadd.f32 0.0, %v394
  %v396 = vpop.f32.mrf.mxu0
  %397 = vmatprep.mubr.bf16.mxu0 0
  %398 = vmatmul.mubr.bf16.gmra.mxu0 %v319
  %v399 = vpop.f32.mrf.mxu0
  %v400 = vadd.f32 0.0, %v399
  %v401 = vpop.f32.mrf.mxu0
  %v402 = vpop.f32.mrf.mxu0
  %v403 = vadd.f32 0.0, %v402
  %v404 = vpop.f32.mrf.mxu0
  %405 = vmatprep.mubr.bf16.mxu0 0
  %406 = vmatmul.mubr.bf16.gmra.mxu0 %v322
  %v407 = vpop.f32.mrf.mxu0
  %v408 = vadd.f32 0.0, %v407
  %v409 = vpop.f32.mrf.mxu0
  %v410 = vpop.f32.mrf.mxu0
  %v411 = vadd.f32 0.0, %v410
  %v412 = vpop.f32.mrf.mxu0
  %413 = vmatprep.mubr.bf16.mxu0 0
  %414 = vmatmul.mubr.bf16.gmra.mxu0 %v325
  %v415 = vpop.f32.mrf.mxu0
  %v416 = vadd.f32 0.0, %v415
  %v417 = vpop.f32.mrf.mxu0
  %v418 = vpop.f32.mrf.mxu0
  %v419 = vadd.f32 0.0, %v418
  %v420 = vpop.f32.mrf.mxu0
  %421 = vmatprep.mubr.bf16.mxu0 0
  %422 = vmatmul.mubr.bf16.gmra.mxu0 %v328
  %v423 = vpop.f32.mrf.mxu0
  %v424 = vadd.f32 0.0, %v423
  %v425 = vpop.f32.mrf.mxu0
  %v426 = vpop.f32.mrf.mxu0
  %v427 = vadd.f32 0.0, %v426
  %v428 = vpop.f32.mrf.mxu0
  %429 = vdwg.mxu0
  %v430 = vpack.c.bf16 %v371, %v368
  %v431 = vpack.c.bf16 %v379, %v376
  %v432 = vpack.c.bf16 %v387, %v384
  %v433 = vpack.c.bf16 %v395, %v392
  %v434 = vpack.c.bf16 %v403, %v400
  %v435 = vpack.c.bf16 %v411, %v408
  %v436 = vpack.c.bf16 %v419, %v416
  %v437 = vpack.c.bf16 %v427, %v424
  %438 = vmatprep.subr.bf16.mxu0 0
  %439 = vmatpush1.bf16.msra.mxu0 %v437
  %440 = vmatprep.subr.bf16.mxu0 0
  %441 = vmatpush1.bf16.msra.mxu0 %v436
  %442 = vmatprep.subr.bf16.mxu0 0
  %443 = vmatpush1.bf16.msra.mxu0 %v435
  %444 = vmatprep.subr.bf16.mxu0 0
  %445 = vmatpush1.bf16.msra.mxu0 %v434
  %446 = vmatprep.subr.bf16.mxu0 0
  %447 = vmatpush1.bf16.msra.mxu0 %v433
  %448 = vmatprep.subr.bf16.mxu0 0
  %449 = vmatpush1.bf16.msra.mxu0 %v432
  %450 = vmatprep.subr.bf16.mxu0 0
  %451 = vmatpush1.bf16.msra.mxu0 %v431
  %452 = vmatprep.subr.bf16.mxu0 0
  %453 = vmatpush1.bf16.msra.mxu0 %v430
  %454 = vmatprep.subr.bf16.mxu0 0
  %455 = vmatpush2.bf16.msra.mxu0 0
  %456 = vmatprep.subr.bf16.mxu0 0
  %457 = vmatpush2.bf16.msra.mxu0 0
  %458 = vmatprep.subr.bf16.mxu0 0
  %459 = vmatpush2.bf16.msra.mxu0 0
  %460 = vmatprep.subr.bf16.mxu0 0
  %461 = vmatpush2.bf16.msra.mxu0 0
  %462 = vmatprep.subr.bf16.mxu0 0
  %463 = vmatpush2.bf16.msra.mxu0 0
  %464 = vmatprep.subr.bf16.mxu0 0
  %465 = vmatpush2.bf16.msra.mxu0 0
  %466 = vmatprep.subr.bf16.mxu0 0
  %467 = vmatpush2.bf16.msra.mxu0 0
  %468 = vmatprep.subr.bf16.mxu0 0
  %469 = vmatpush2.bf16.msra.mxu0 0
  %470 = vmatprep.mubr.bf16.mxu0 0
  %471 = vmatmul.mubr.bf16.gmra.mxu0 %v64
  %v472 = vpop.f32.mrf.mxu0
  %v473 = vadd.f32 0.0, %v472
  %v474 = vpop.f32.mrf.mxu0
  %v475 = vpop.f32.mrf.mxu0
  %v476 = vadd.f32 0.0, %v475
  %v477 = vpop.f32.mrf.mxu0
  %478 = vmatprep.mubr.bf16.mxu0 0
  %479 = vmatmul.mubr.bf16.gmra.mxu0 %v65
  %v480 = vpop.f32.mrf.mxu0
  %v481 = vadd.f32 0.0, %v480
  %v482 = vpop.f32.mrf.mxu0
  %v483 = vpop.f32.mrf.mxu0
  %v484 = vadd.f32 0.0, %v483
  %v485 = vpop.f32.mrf.mxu0
  %486 = vmatprep.mubr.bf16.mxu0 0
  %487 = vmatmul.mubr.bf16.gmra.mxu0 %v66
  %v488 = vpop.f32.mrf.mxu0
  %v489 = vadd.f32 0.0, %v488
  %v490 = vpop.f32.mrf.mxu0
  %v491 = vpop.f32.mrf.mxu0
  %v492 = vadd.f32 0.0, %v491
  %v493 = vpop.f32.mrf.mxu0
  %494 = vmatprep.mubr.bf16.mxu0 0
  %495 = vmatmul.mubr.bf16.gmra.mxu0 %v67
  %v496 = vpop.f32.mrf.mxu0
  %v497 = vadd.f32 0.0, %v496
  %v498 = vpop.f32.mrf.mxu0
  %v499 = vpop.f32.mrf.mxu0
  %v500 = vadd.f32 0.0, %v499
  %v501 = vpop.f32.mrf.mxu0
  %502 = vmatprep.mubr.bf16.mxu0 0
  %503 = vmatmul.mubr.bf16.gmra.mxu0 %v68
  %v504 = vpop.f32.mrf.mxu0
  %v505 = vadd.f32 0.0, %v504
  %v506 = vpop.f32.mrf.mxu0
  %v507 = vpop.f32.mrf.mxu0
  %v508 = vadd.f32 0.0, %v507
  %v509 = vpop.f32.mrf.mxu0
  %510 = vmatprep.mubr.bf16.mxu0 0
  %511 = vmatmul.mubr.bf16.gmra.mxu0 %v69
  %v512 = vpop.f32.mrf.mxu0
  %v513 = vadd.f32 0.0, %v512
  %v514 = vpop.f32.mrf.mxu0
  %v515 = vpop.f32.mrf.mxu0
  %v516 = vadd.f32 0.0, %v515
  %v517 = vpop.f32.mrf.mxu0
  %518 = vmatprep.mubr.bf16.mxu0 0
  %519 = vmatmul.mubr.bf16.gmra.mxu0 %v70
  %v520 = vpop.f32.mrf.mxu0
  %v521 = vadd.f32 0.0, %v520
  %v522 = vpop.f32.mrf.mxu0
  %v523 = vpop.f32.mrf.mxu0
  %v524 = vadd.f32 0.0, %v523
  %v525 = vpop.f32.mrf.mxu0
  %526 = vmatprep.mubr.bf16.mxu0 0
  %527 = vmatmul.mubr.bf16.gmra.mxu0 %v71
  %v528 = vpop.f32.mrf.mxu0
  %v529 = vadd.f32 0.0, %v528
  %v530 = vpop.f32.mrf.mxu0
  %v531 = vpop.f32.mrf.mxu0
  %v532 = vadd.f32 0.0, %v531
  %v533 = vpop.f32.mrf.mxu0
  %534 = vdwg.mxu0
  %536 = vset.pattern.permute.xlu0 0
  %537 = vperm.xlu0 %536, %v72
  %v538 = vpop.permute.xlu0 %537
  %541 = vset.pattern.permute.xlu0 0
  %542 = vperm.xlu0 %541, %v73
  %v543 = vpop.permute.xlu0 %542
  %546 = vset.pattern.permute.xlu0 0
  %547 = vperm.xlu0 %546, %v74
  %v548 = vpop.permute.xlu0 %547
  %551 = vset.pattern.permute.xlu0 0
  %552 = vperm.xlu0 %551, %v75
  %v553 = vpop.permute.xlu0 %552
  %556 = vset.pattern.permute.xlu0 0
  %557 = vperm.xlu0 %556, %v76
  %v558 = vpop.permute.xlu0 %557
  %561 = vset.pattern.permute.xlu0 0
  %562 = vperm.xlu0 %561, %v77
  %v563 = vpop.permute.xlu0 %562
  %566 = vset.pattern.permute.xlu0 0
  %567 = vperm.xlu0 %566, %v78
  %v568 = vpop.permute.xlu0 %567
  %571 = vset.pattern.permute.xlu0 0
  %572 = vperm.xlu0 %571, %v79
  %v573 = vpop.permute.xlu0 %572
  %576 = vset.pattern.permute.xlu0 0
  %577 = vperm.xlu0 %576, %v80
  %v578 = vpop.permute.xlu0 %577
  %581 = vset.pattern.permute.xlu0 0
  %582 = vperm.xlu0 %581, %v81
  %v583 = vpop.permute.xlu0 %582
  %586 = vset.pattern.permute.xlu0 0
  %587 = vperm.xlu0 %586, %v82
  %v588 = vpop.permute.xlu0 %587
  %591 = vset.pattern.permute.xlu0 0
  %592 = vperm.xlu0 %591, %v83
  %v593 = vpop.permute.xlu0 %592
  %596 = vset.pattern.permute.xlu0 0
  %597 = vperm.xlu0 %596, %v84
  %v598 = vpop.permute.xlu0 %597
  %601 = vset.pattern.permute.xlu0 0
  %602 = vperm.xlu0 %601, %v85
  %v603 = vpop.permute.xlu0 %602
  %606 = vset.pattern.permute.xlu0 0
  %607 = vperm.xlu0 %606, %v86
  %v608 = vpop.permute.xlu0 %607
  %611 = vset.pattern.permute.xlu0 0
  %612 = vperm.xlu0 %611, %v87
  %v613 = vpop.permute.xlu0 %612
  %v615 = vmul.f32 %v473, %v538
  %v616 = vmul.f32 %v476, %v543
  %v617 = vmul.f32 %v481, %v548
  %v618 = vmul.f32 %v484, %v553
  %v619 = vmul.f32 %v489, %v558
  %v620 = vmul.f32 %v492, %v563
  %v621 = vmul.f32 %v497, %v568
  %v622 = vmul.f32 %v500, %v573
  %v623 = vmul.f32 %v505, %v578
  %v624 = vmul.f32 %v508, %v583
  %v625 = vmul.f32 %v513, %v588
  %v626 = vmul.f32 %v516, %v593
  %v627 = vmul.f32 %v521, %v598
  %v628 = vmul.f32 %v524, %v603
  %v629 = vmul.f32 %v529, %v608
  %v630 = vmul.f32 %v532, %v613
  %v631 = vld [vmem:[%s7] sm:$0x3]
  %v633 = vand.u32 %v631, %v180
  %635 = vmatprep.subr.bf16.mxu0 0
  %636 = vmatpush1.bf16.msra.mxu0 0
  %637 = vmatprep.subr.bf16.mxu0 0
  %638 = vmatpush1.bf16.msra.mxu0 0
  %639 = vmatprep.subr.bf16.mxu0 0
  %640 = vmatpush1.bf16.msra.mxu0 0
  %641 = vmatprep.subr.bf16.mxu0 0
  %642 = vmatpush1.bf16.msra.mxu0 0
  %643 = vmatprep.subr.bf16.mxu0 0
  %644 = vmatpush1.bf16.msra.mxu0 0
  %645 = vmatprep.subr.bf16.mxu0 0
  %646 = vmatpush1.bf16.msra.mxu0 0
  %647 = vmatprep.subr.bf16.mxu0 0
  %648 = vmatpush1.bf16.msra.mxu0 0
  %649 = vmatprep.subr.bf16.mxu0 0
  %650 = vmatpush1.bf16.msra.mxu0 %v633
  %651 = vmatprep.subr.bf16.mxu0 0
  %652 = vmatpush2.bf16.msra.mxu0 0
  %653 = vmatprep.subr.bf16.mxu0 0
  %654 = vmatpush2.bf16.msra.mxu0 0
  %655 = vmatprep.subr.bf16.mxu0 0
  %656 = vmatpush2.bf16.msra.mxu0 0
  %657 = vmatprep.subr.bf16.mxu0 0
  %658 = vmatpush2.bf16.msra.mxu0 0
  %659 = vmatprep.subr.bf16.mxu0 0
  %660 = vmatpush2.bf16.msra.mxu0 0
  %661 = vmatprep.subr.bf16.mxu0 0
  %662 = vmatpush2.bf16.msra.mxu0 0
  %663 = vmatprep.subr.bf16.mxu0 0
  %664 = vmatpush2.bf16.msra.mxu0 0
  %665 = vmatprep.subr.bf16.mxu0 0
  %666 = vmatpush2.bf16.msra.mxu0 0
  %667 = vmatprep.mubr.bf16.mxu0 0
  %668 = vmatmul.mubr.bf16.gmra.mxu0 %v154
  %v669 = vpop.f32.mrf.mxu0
  %v670 = vadd.f32 0.0, %v669
  %v671 = vpop.f32.mrf.mxu0
  %v672 = vpop.f32.mrf.mxu0
  %v673 = vadd.f32 0.0, %v672
  %v674 = vpop.f32.mrf.mxu0
  %675 = vmatprep.mubr.bf16.mxu0 0
  %676 = vmatmul.mubr.bf16.gmra.mxu0 %v157
  %v677 = vpop.f32.mrf.mxu0
  %v678 = vadd.f32 0.0, %v677
  %v679 = vpop.f32.mrf.mxu0
  %v680 = vpop.f32.mrf.mxu0
  %v681 = vadd.f32 0.0, %v680
  %v682 = vpop.f32.mrf.mxu0
  %683 = vmatprep.mubr.bf16.mxu0 0
  %684 = vmatmul.mubr.bf16.gmra.mxu0 %v160
  %v685 = vpop.f32.mrf.mxu0
  %v686 = vadd.f32 0.0, %v685
  %v687 = vpop.f32.mrf.mxu0
  %v688 = vpop.f32.mrf.mxu0
  %v689 = vadd.f32 0.0, %v688
  %v690 = vpop.f32.mrf.mxu0
  %691 = vmatprep.mubr.bf16.mxu0 0
  %692 = vmatmul.mubr.bf16.gmra.mxu0 %v163
  %v693 = vpop.f32.mrf.mxu0
  %v694 = vadd.f32 0.0, %v693
  %v695 = vpop.f32.mrf.mxu0
  %v696 = vpop.f32.mrf.mxu0
  %v697 = vadd.f32 0.0, %v696
  %v698 = vpop.f32.mrf.mxu0
  %699 = vmatprep.mubr.bf16.mxu0 0
  %700 = vmatmul.mubr.bf16.gmra.mxu0 %v166
  %v701 = vpop.f32.mrf.mxu0
  %v702 = vadd.f32 0.0, %v701
  %v703 = vpop.f32.mrf.mxu0
  %v704 = vpop.f32.mrf.mxu0
  %v705 = vadd.f32 0.0, %v704
  %v706 = vpop.f32.mrf.mxu0
  %707 = vmatprep.mubr.bf16.mxu0 0
  %708 = vmatmul.mubr.bf16.gmra.mxu0 %v169
  %v709 = vpop.f32.mrf.mxu0
  %v710 = vadd.f32 0.0, %v709
  %v711 = vpop.f32.mrf.mxu0
  %v712 = vpop.f32.mrf.mxu0
  %v713 = vadd.f32 0.0, %v712
  %v714 = vpop.f32.mrf.mxu0
  %715 = vmatprep.mubr.bf16.mxu0 0
  %716 = vmatmul.mubr.bf16.gmra.mxu0 %v172
  %v717 = vpop.f32.mrf.mxu0
  %v718 = vadd.f32 0.0, %v717
  %v719 = vpop.f32.mrf.mxu0
  %v720 = vpop.f32.mrf.mxu0
  %v721 = vadd.f32 0.0, %v720
  %v722 = vpop.f32.mrf.mxu0
  %723 = vmatprep.mubr.bf16.mxu0 0
  %724 = vmatmul.mubr.bf16.gmra.mxu0 %v175
  %v725 = vpop.f32.mrf.mxu0
  %v726 = vadd.f32 0.0, %v725
  %v727 = vpop.f32.mrf.mxu0
  %v728 = vpop.f32.mrf.mxu0
  %v729 = vadd.f32 0.0, %v728
  %v730 = vpop.f32.mrf.mxu0
  %731 = vdwg.mxu0
  %v732 = vadd.f32 %v615, %v670
  %v733 = vadd.f32 %v616, %v673
  %v734 = vadd.f32 %v617, %v678
  %v735 = vadd.f32 %v618, %v681
  %v736 = vadd.f32 %v619, %v686
  %v737 = vadd.f32 %v620, %v689
  %v738 = vadd.f32 %v621, %v694
  %v739 = vadd.f32 %v622, %v697
  %v740 = vadd.f32 %v623, %v702
  %v741 = vadd.f32 %v624, %v705
  %v742 = vadd.f32 %v625, %v710
  %v743 = vadd.f32 %v626, %v713
  %v744 = vadd.f32 %v627, %v718
  %v745 = vadd.f32 %v628, %v721
  %v746 = vadd.f32 %v629, %v726
  %v747 = vadd.f32 %v630, %v729
  %v748 = vld [vmem:[%s6] sm:$0x1]
  %v750 = vlaneseq
  %v751 = vshrl.u32 %v750, 7
  %v752 = vsub.s32 0, %v751
  %v753 = vrot.slane %v748, %v752
  %v755 = vadd.f32 %v732, %v753
  %v756 = vadd.f32 %v733, %v753
  %v757 = vadd.f32 %v734, %v753
  %v758 = vadd.f32 %v735, %v753
  %v759 = vadd.f32 %v736, %v753
  %v760 = vadd.f32 %v737, %v753
  %v761 = vadd.f32 %v738, %v753
  %v762 = vadd.f32 %v739, %v753
  %v763 = vadd.f32 %v740, %v753
  %v764 = vadd.f32 %v741, %v753
  %v765 = vadd.f32 %v742, %v753
  %v766 = vadd.f32 %v743, %v753
  %v767 = vadd.f32 %v744, %v753
  %v768 = vadd.f32 %v745, %v753
  %v769 = vadd.f32 %v746, %v753
  %v770 = vadd.f32 %v747, %v753
  %v771 = vmax.f32 %v755, 0.0
  %v772 = vmax.f32 %v756, 0.0
  %v773 = vmax.f32 %v757, 0.0
  %v774 = vmax.f32 %v758, 0.0
  %v775 = vmax.f32 %v759, 0.0
  %v776 = vmax.f32 %v760, 0.0
  %v777 = vmax.f32 %v761, 0.0
  %v778 = vmax.f32 %v762, 0.0
  %v779 = vmax.f32 %v763, 0.0
  %v780 = vmax.f32 %v764, 0.0
  %v781 = vmax.f32 %v765, 0.0
  %v782 = vmax.f32 %v766, 0.0
  %v783 = vmax.f32 %v767, 0.0
  %v784 = vmax.f32 %v768, 0.0
  %v785 = vmax.f32 %v769, 0.0
  %v786 = vmax.f32 %v770, 0.0
  %v787 = vpack.c.bf16 %v772, %v771
  %v788 = vpack.c.bf16 %v774, %v773
  %v789 = vpack.c.bf16 %v776, %v775
  %v790 = vpack.c.bf16 %v778, %v777
  %v791 = vpack.c.bf16 %v780, %v779
  %v792 = vpack.c.bf16 %v782, %v781
  %v793 = vpack.c.bf16 %v784, %v783
  %v794 = vpack.c.bf16 %v786, %v785
  %v795 = vld [vmem:[%s8] sm:$0xf]
  %v796 = vld [vmem:[%s8 + $0x4] sm:$0xf]
  %v797 = vld [vmem:[%s9] sm:$0x1]
  %v799 = vlaneseq
  %v800 = vshrl.u32 %v799, 7
  %v801 = vsub.s32 0, %v800
  %v802 = vrot.slane %v797, %v801
  %v806 = vunpack.c.l.b16 %v795
  %v807 = vunpack.c.l.b16 %v796
  %v808 = vpack.c.b16 %v807, %v806
  %vm810 = vcmask 130048
  %v812 = vsel %vm810, %v787, 0
  %v815 = vsel %vm810, %v788, 0
  %v818 = vsel %vm810, %v789, 0
  %v821 = vsel %vm810, %v790, 0
  %v824 = vsel %vm810, %v791, 0
  %v827 = vsel %vm810, %v792, 0
  %v830 = vsel %vm810, %v793, 0
  %v833 = vsel %vm810, %v794, 0
  %835 = vmatprep.subr.bf16.mxu0 0
  %836 = vmatpush1.bf16.msra.mxu0 0
  %837 = vmatprep.subr.bf16.mxu0 0
  %838 = vmatpush1.bf16.msra.mxu0 0
  %839 = vmatprep.subr.bf16.mxu0 0
  %840 = vmatpush1.bf16.msra.mxu0 0
  %841 = vmatprep.subr.bf16.mxu0 0
  %842 = vmatpush1.bf16.msra.mxu0 0
  %843 = vmatprep.subr.bf16.mxu0 0
  %844 = vmatpush1.bf16.msra.mxu0 0
  %845 = vmatprep.subr.bf16.mxu0 0
  %846 = vmatpush1.bf16.msra.mxu0 0
  %847 = vmatprep.subr.bf16.mxu0 0
  %848 = vmatpush1.bf16.msra.mxu0 0
  %849 = vmatprep.subr.bf16.mxu0 0
  %850 = vmatpush1.bf16.msra.mxu0 %v808
  %851 = vmatprep.subr.bf16.mxu0 0
  %852 = vmatpush2.bf16.msra.mxu0 0
  %853 = vmatprep.subr.bf16.mxu0 0
  %854 = vmatpush2.bf16.msra.mxu0 0
  %855 = vmatprep.subr.bf16.mxu0 0
  %856 = vmatpush2.bf16.msra.mxu0 0
  %857 = vmatprep.subr.bf16.mxu0 0
  %858 = vmatpush2.bf16.msra.mxu0 0
  %859 = vmatprep.subr.bf16.mxu0 0
  %860 = vmatpush2.bf16.msra.mxu0 0
  %861 = vmatprep.subr.bf16.mxu0 0
  %862 = vmatpush2.bf16.msra.mxu0 0
  %863 = vmatprep.subr.bf16.mxu0 0
  %864 = vmatpush2.bf16.msra.mxu0 0
  %865 = vmatprep.subr.bf16.mxu0 0
  %866 = vmatpush2.bf16.msra.mxu0 0
  %867 = vmatprep.mubr.bf16.mxu0 0
  %868 = vmatmul.mubr.bf16.gmra.mxu0 %v812
  %v869 = vpop.f32.mrf.mxu0
  %v870 = vadd.f32 %v802, %v869
  %v871 = vpop.f32.mrf.mxu0
  %v872 = vpop.f32.mrf.mxu0
  %v873 = vadd.f32 %v802, %v872
  %v874 = vpop.f32.mrf.mxu0
  %875 = vmatprep.mubr.bf16.mxu0 0
  %876 = vmatmul.mubr.bf16.gmra.mxu0 %v815
  %v877 = vpop.f32.mrf.mxu0
  %v878 = vadd.f32 %v802, %v877
  %v879 = vpop.f32.mrf.mxu0
  %v880 = vpop.f32.mrf.mxu0
  %v881 = vadd.f32 %v802, %v880
  %v882 = vpop.f32.mrf.mxu0
  %883 = vmatprep.mubr.bf16.mxu0 0
  %884 = vmatmul.mubr.bf16.gmra.mxu0 %v818
  %v885 = vpop.f32.mrf.mxu0
  %v886 = vadd.f32 %v802, %v885
  %v887 = vpop.f32.mrf.mxu0
  %v888 = vpop.f32.mrf.mxu0
  %v889 = vadd.f32 %v802, %v888
  %v890 = vpop.f32.mrf.mxu0
  %891 = vmatprep.mubr.bf16.mxu0 0
  %892 = vmatmul.mubr.bf16.gmra.mxu0 %v821
  %v893 = vpop.f32.mrf.mxu0
  %v894 = vadd.f32 %v802, %v893
  %v895 = vpop.f32.mrf.mxu0
  %v896 = vpop.f32.mrf.mxu0
  %v897 = vadd.f32 %v802, %v896
  %v898 = vpop.f32.mrf.mxu0
  %899 = vmatprep.mubr.bf16.mxu0 0
  %900 = vmatmul.mubr.bf16.gmra.mxu0 %v824
  %v901 = vpop.f32.mrf.mxu0
  %v902 = vadd.f32 %v802, %v901
  %v903 = vpop.f32.mrf.mxu0
  %v904 = vpop.f32.mrf.mxu0
  %v905 = vadd.f32 %v802, %v904
  %v906 = vpop.f32.mrf.mxu0
  %907 = vmatprep.mubr.bf16.mxu0 0
  %908 = vmatmul.mubr.bf16.gmra.mxu0 %v827
  %v909 = vpop.f32.mrf.mxu0
  %v910 = vadd.f32 %v802, %v909
  %v911 = vpop.f32.mrf.mxu0
  %v912 = vpop.f32.mrf.mxu0
  %v913 = vadd.f32 %v802, %v912
  %v914 = vpop.f32.mrf.mxu0
  %915 = vmatprep.mubr.bf16.mxu0 0
  %916 = vmatmul.mubr.bf16.gmra.mxu0 %v830
  %v917 = vpop.f32.mrf.mxu0
  %v918 = vadd.f32 %v802, %v917
  %v919 = vpop.f32.mrf.mxu0
  %v920 = vpop.f32.mrf.mxu0
  %v921 = vadd.f32 %v802, %v920
  %v922 = vpop.f32.mrf.mxu0
  %923 = vmatprep.mubr.bf16.mxu0 0
  %924 = vmatmul.mubr.bf16.gmra.mxu0 %v833
  %v925 = vpop.f32.mrf.mxu0
  %v926 = vadd.f32 %v802, %v925
  %v927 = vpop.f32.mrf.mxu0
  %v928 = vpop.f32.mrf.mxu0
  %v929 = vadd.f32 %v802, %v928
  %v930 = vpop.f32.mrf.mxu0
  %931 = vdwg.mxu0
  %v932 = vmax.f32 %v870, 0.0
  %v933 = vmax.f32 %v873, 0.0
  %v934 = vmax.f32 %v878, 0.0
  %v935 = vmax.f32 %v881, 0.0
  %v936 = vmax.f32 %v886, 0.0
  %v937 = vmax.f32 %v889, 0.0
  %v938 = vmax.f32 %v894, 0.0
  %v939 = vmax.f32 %v897, 0.0
  %v940 = vmax.f32 %v902, 0.0
  %v941 = vmax.f32 %v905, 0.0
  %v942 = vmax.f32 %v910, 0.0
  %v943 = vmax.f32 %v913, 0.0
  %v944 = vmax.f32 %v918, 0.0
  %v945 = vmax.f32 %v921, 0.0
  %v946 = vmax.f32 %v926, 0.0
  %v947 = vmax.f32 %v929, 0.0
  %v948 = vpack.c.bf16 %v933, %v932
  %v949 = vpack.c.bf16 %v935, %v934
  %v950 = vpack.c.bf16 %v937, %v936
  %v951 = vpack.c.bf16 %v939, %v938
  %v952 = vpack.c.bf16 %v941, %v940
  %v953 = vpack.c.bf16 %v943, %v942
  %v954 = vpack.c.bf16 %v945, %v944
  %v955 = vpack.c.bf16 %v947, %v946
  %v956 = vld [vmem:[%s10] sm:$0xf]
  %v957 = vld [vmem:[%s10 + $0x4] sm:$0xf]
  %v960 = vunpack.c.l.b16 %v956
  %v961 = vunpack.c.l.b16 %v957
  %v962 = vpack.c.b16 %v961, %v960
  %v965 = vsel %vm810, %v948, 0
  %v968 = vsel %vm810, %v949, 0
  %v971 = vsel %vm810, %v950, 0
  %v974 = vsel %vm810, %v951, 0
  %v977 = vsel %vm810, %v952, 0
  %v980 = vsel %vm810, %v953, 0
  %v983 = vsel %vm810, %v954, 0
  %v986 = vsel %vm810, %v955, 0
  %988 = vmatprep.subr.bf16.mxu0 0
  %989 = vmatpush1.bf16.msra.mxu0 0
  %990 = vmatprep.subr.bf16.mxu0 0
  %991 = vmatpush1.bf16.msra.mxu0 0
  %992 = vmatprep.subr.bf16.mxu0 0
  %993 = vmatpush1.bf16.msra.mxu0 0
  %994 = vmatprep.subr.bf16.mxu0 0
  %995 = vmatpush1.bf16.msra.mxu0 0
  %996 = vmatprep.subr.bf16.mxu0 0
  %997 = vmatpush1.bf16.msra.mxu0 0
  %998 = vmatprep.subr.bf16.mxu0 0
  %999 = vmatpush1.bf16.msra.mxu0 0
  %1000 = vmatprep.subr.bf16.mxu0 0
  %1001 = vmatpush1.bf16.msra.mxu0 0
  %1002 = vmatprep.subr.bf16.mxu0 0
  %1003 = vmatpush1.bf16.msra.mxu0 %v962
  %1004 = vmatprep.subr.bf16.mxu0 0
  %1005 = vmatpush2.bf16.msra.mxu0 0
  %1006 = vmatprep.subr.bf16.mxu0 0
  %1007 = vmatpush2.bf16.msra.mxu0 0
  %1008 = vmatprep.subr.bf16.mxu0 0
  %1009 = vmatpush2.bf16.msra.mxu0 0
  %1010 = vmatprep.subr.bf16.mxu0 0
  %1011 = vmatpush2.bf16.msra.mxu0 0
  %1012 = vmatprep.subr.bf16.mxu0 0
  %1013 = vmatpush2.bf16.msra.mxu0 0
  %1014 = vmatprep.subr.bf16.mxu0 0
  %1015 = vmatpush2.bf16.msra.mxu0 0
  %1016 = vmatprep.subr.bf16.mxu0 0
  %1017 = vmatpush2.bf16.msra.mxu0 0
  %1018 = vmatprep.subr.bf16.mxu0 0
  %1019 = vmatpush2.bf16.msra.mxu0 0
  %1020 = vmatprep.mubr.bf16.mxu0 0
  %1021 = vmatmul.mubr.bf16.gmra.mxu0 %v965
  %v1022 = vpop.f32.mrf.mxu0
  %v1023 = vadd.f32 0.0, %v1022
  %v1024 = vpop.f32.mrf.mxu0
  %v1025 = vpop.f32.mrf.mxu0
  %v1026 = vadd.f32 0.0, %v1025
  %v1027 = vpop.f32.mrf.mxu0
  %1028 = vmatprep.mubr.bf16.mxu0 0
  %1029 = vmatmul.mubr.bf16.gmra.mxu0 %v968
  %v1030 = vpop.f32.mrf.mxu0
  %v1031 = vadd.f32 0.0, %v1030
  %v1032 = vpop.f32.mrf.mxu0
  %v1033 = vpop.f32.mrf.mxu0
  %v1034 = vadd.f32 0.0, %v1033
  %v1035 = vpop.f32.mrf.mxu0
  %1036 = vmatprep.mubr.bf16.mxu0 0
  %1037 = vmatmul.mubr.bf16.gmra.mxu0 %v971
  %v1038 = vpop.f32.mrf.mxu0
  %v1039 = vadd.f32 0.0, %v1038
  %v1040 = vpop.f32.mrf.mxu0
  %v1041 = vpop.f32.mrf.mxu0
  %v1042 = vadd.f32 0.0, %v1041
  %v1043 = vpop.f32.mrf.mxu0
  %1044 = vmatprep.mubr.bf16.mxu0 0
  %1045 = vmatmul.mubr.bf16.gmra.mxu0 %v974
  %v1046 = vpop.f32.mrf.mxu0
  %v1047 = vadd.f32 0.0, %v1046
  %v1048 = vpop.f32.mrf.mxu0
  %v1049 = vpop.f32.mrf.mxu0
  %v1050 = vadd.f32 0.0, %v1049
  %v1051 = vpop.f32.mrf.mxu0
  %1052 = vmatprep.mubr.bf16.mxu0 0
  %1053 = vmatmul.mubr.bf16.gmra.mxu0 %v977
  %v1054 = vpop.f32.mrf.mxu0
  %v1055 = vadd.f32 0.0, %v1054
  %v1056 = vpop.f32.mrf.mxu0
  %v1057 = vpop.f32.mrf.mxu0
  %v1058 = vadd.f32 0.0, %v1057
  %v1059 = vpop.f32.mrf.mxu0
  %1060 = vmatprep.mubr.bf16.mxu0 0
  %1061 = vmatmul.mubr.bf16.gmra.mxu0 %v980
  %v1062 = vpop.f32.mrf.mxu0
  %v1063 = vadd.f32 0.0, %v1062
  %v1064 = vpop.f32.mrf.mxu0
  %v1065 = vpop.f32.mrf.mxu0
  %v1066 = vadd.f32 0.0, %v1065
  %v1067 = vpop.f32.mrf.mxu0
  %1068 = vmatprep.mubr.bf16.mxu0 0
  %1069 = vmatmul.mubr.bf16.gmra.mxu0 %v983
  %v1070 = vpop.f32.mrf.mxu0
  %v1071 = vadd.f32 0.0, %v1070
  %v1072 = vpop.f32.mrf.mxu0
  %v1073 = vpop.f32.mrf.mxu0
  %v1074 = vadd.f32 0.0, %v1073
  %v1075 = vpop.f32.mrf.mxu0
  %1076 = vmatprep.mubr.bf16.mxu0 0
  %1077 = vmatmul.mubr.bf16.gmra.mxu0 %v986
  %v1078 = vpop.f32.mrf.mxu0
  %v1079 = vadd.f32 0.0, %v1078
  %v1080 = vpop.f32.mrf.mxu0
  %v1081 = vpop.f32.mrf.mxu0
  %v1082 = vadd.f32 0.0, %v1081
  %v1083 = vpop.f32.mrf.mxu0
  %1084 = vdwg.mxu0
  %v1085 = vpack.c.bf16 %v1026, %v1023
  %v1086 = vpack.c.bf16 %v1034, %v1031
  %v1087 = vpack.c.bf16 %v1042, %v1039
  %v1088 = vpack.c.bf16 %v1050, %v1047
  %v1089 = vpack.c.bf16 %v1058, %v1055
  %v1090 = vpack.c.bf16 %v1066, %v1063
  %v1091 = vpack.c.bf16 %v1074, %v1071
  %v1092 = vpack.c.bf16 %v1082, %v1079
  %1093 = vmatprep.subr.bf16.mxu0 0
  %1094 = vmatpush1.bf16.msra.mxu0 %v1092
  %1095 = vmatprep.subr.bf16.mxu0 0
  %1096 = vmatpush1.bf16.msra.mxu0 %v1091
  %1097 = vmatprep.subr.bf16.mxu0 0
  %1098 = vmatpush1.bf16.msra.mxu0 %v1090
  %1099 = vmatprep.subr.bf16.mxu0 0
  %1100 = vmatpush1.bf16.msra.mxu0 %v1089
  %1101 = vmatprep.subr.bf16.mxu0 0
  %1102 = vmatpush1.bf16.msra.mxu0 %v1088
  %1103 = vmatprep.subr.bf16.mxu0 0
  %1104 = vmatpush1.bf16.msra.mxu0 %v1087
  %1105 = vmatprep.subr.bf16.mxu0 0
  %1106 = vmatpush1.bf16.msra.mxu0 %v1086
  %1107 = vmatprep.subr.bf16.mxu0 0
  %1108 = vmatpush1.bf16.msra.mxu0 %v1085
  %1109 = vmatprep.subr.bf16.mxu0 0
  %1110 = vmatpush2.bf16.msra.mxu0 0
  %1111 = vmatprep.subr.bf16.mxu0 0
  %1112 = vmatpush2.bf16.msra.mxu0 0
  %1113 = vmatprep.subr.bf16.mxu0 0
  %1114 = vmatpush2.bf16.msra.mxu0 0
  %1115 = vmatprep.subr.bf16.mxu0 0
  %1116 = vmatpush2.bf16.msra.mxu0 0
  %1117 = vmatprep.subr.bf16.mxu0 0
  %1118 = vmatpush2.bf16.msra.mxu0 0
  %1119 = vmatprep.subr.bf16.mxu0 0
  %1120 = vmatpush2.bf16.msra.mxu0 0
  %1121 = vmatprep.subr.bf16.mxu0 0
  %1122 = vmatpush2.bf16.msra.mxu0 0
  %1123 = vmatprep.subr.bf16.mxu0 0
  %1124 = vmatpush2.bf16.msra.mxu0 0
  %1125 = vmatprep.mubr.bf16.mxu0 0
  %1126 = vmatmul.mubr.bf16.gmra.mxu0 %v64
  %v1127 = vpop.f32.mrf.mxu0
  %v1128 = vadd.f32 0.0, %v1127
  %v1129 = vpop.f32.mrf.mxu0
  %v1130 = vpop.f32.mrf.mxu0
  %v1131 = vadd.f32 0.0, %v1130
  %v1132 = vpop.f32.mrf.mxu0
  %1133 = vmatprep.mubr.bf16.mxu0 0
  %1134 = vmatmul.mubr.bf16.gmra.mxu0 %v65
  %v1135 = vpop.f32.mrf.mxu0
  %v1136 = vadd.f32 0.0, %v1135
  %v1137 = vpop.f32.mrf.mxu0
  %v1138 = vpop.f32.mrf.mxu0
  %v1139 = vadd.f32 0.0, %v1138
  %v1140 = vpop.f32.mrf.mxu0
  %1141 = vmatprep.mubr.bf16.mxu0 0
  %1142 = vmatmul.mubr.bf16.gmra.mxu0 %v66
  %v1143 = vpop.f32.mrf.mxu0
  %v1144 = vadd.f32 0.0, %v1143
  %v1145 = vpop.f32.mrf.mxu0
  %v1146 = vpop.f32.mrf.mxu0
  %v1147 = vadd.f32 0.0, %v1146
  %v1148 = vpop.f32.mrf.mxu0
  %1149 = vmatprep.mubr.bf16.mxu0 0
  %1150 = vmatmul.mubr.bf16.gmra.mxu0 %v67
  %v1151 = vpop.f32.mrf.mxu0
  %v1152 = vadd.f32 0.0, %v1151
  %v1153 = vpop.f32.mrf.mxu0
  %v1154 = vpop.f32.mrf.mxu0
  %v1155 = vadd.f32 0.0, %v1154
  %v1156 = vpop.f32.mrf.mxu0
  %1157 = vmatprep.mubr.bf16.mxu0 0
  %1158 = vmatmul.mubr.bf16.gmra.mxu0 %v68
  %v1159 = vpop.f32.mrf.mxu0
  %v1160 = vadd.f32 0.0, %v1159
  %v1161 = vpop.f32.mrf.mxu0
  %v1162 = vpop.f32.mrf.mxu0
  %v1163 = vadd.f32 0.0, %v1162
  %v1164 = vpop.f32.mrf.mxu0
  %1165 = vmatprep.mubr.bf16.mxu0 0
  %1166 = vmatmul.mubr.bf16.gmra.mxu0 %v69
  %v1167 = vpop.f32.mrf.mxu0
  %v1168 = vadd.f32 0.0, %v1167
  %v1169 = vpop.f32.mrf.mxu0
  %v1170 = vpop.f32.mrf.mxu0
  %v1171 = vadd.f32 0.0, %v1170
  %v1172 = vpop.f32.mrf.mxu0
  %1173 = vmatprep.mubr.bf16.mxu0 0
  %1174 = vmatmul.mubr.bf16.gmra.mxu0 %v70
  %v1175 = vpop.f32.mrf.mxu0
  %v1176 = vadd.f32 0.0, %v1175
  %v1177 = vpop.f32.mrf.mxu0
  %v1178 = vpop.f32.mrf.mxu0
  %v1179 = vadd.f32 0.0, %v1178
  %v1180 = vpop.f32.mrf.mxu0
  %1181 = vmatprep.mubr.bf16.mxu0 0
  %1182 = vmatmul.mubr.bf16.gmra.mxu0 %v71
  %v1183 = vpop.f32.mrf.mxu0
  %v1184 = vadd.f32 0.0, %v1183
  %v1185 = vpop.f32.mrf.mxu0
  %v1186 = vpop.f32.mrf.mxu0
  %v1187 = vadd.f32 0.0, %v1186
  %v1188 = vpop.f32.mrf.mxu0
  %1189 = vdwg.mxu0
  %v1190 = vmul.f32 %v1128, %v538
  %v1191 = vmul.f32 %v1131, %v543
  %v1192 = vmul.f32 %v1136, %v548
  %v1193 = vmul.f32 %v1139, %v553
  %v1194 = vmul.f32 %v1144, %v558
  %v1195 = vmul.f32 %v1147, %v563
  %v1196 = vmul.f32 %v1152, %v568
  %v1197 = vmul.f32 %v1155, %v573
  %v1198 = vmul.f32 %v1160, %v578
  %v1199 = vmul.f32 %v1163, %v583
  %v1200 = vmul.f32 %v1168, %v588
  %v1201 = vmul.f32 %v1171, %v593
  %v1202 = vmul.f32 %v1176, %v598
  %v1203 = vmul.f32 %v1179, %v603
  %v1204 = vmul.f32 %v1184, %v608
  %v1205 = vmul.f32 %v1187, %v613
  %v1206 = vld [vmem:[%s12] sm:$0xf]
  %v1207 = vld [vmem:[%s12 + $0x4] sm:$0xf]
  %v1210 = vunpack.c.l.b16 %v1206
  %v1211 = vunpack.c.l.b16 %v1207
  %v1212 = vpack.c.b16 %v1211, %v1210
  %1214 = vmatprep.subr.bf16.mxu0 0
  %1215 = vmatpush1.bf16.msra.mxu0 0
  %1216 = vmatprep.subr.bf16.mxu0 0
  %1217 = vmatpush1.bf16.msra.mxu0 0
  %1218 = vmatprep.subr.bf16.mxu0 0
  %1219 = vmatpush1.bf16.msra.mxu0 0
  %1220 = vmatprep.subr.bf16.mxu0 0
  %1221 = vmatpush1.bf16.msra.mxu0 0
  %1222 = vmatprep.subr.bf16.mxu0 0
  %1223 = vmatpush1.bf16.msra.mxu0 0
  %1224 = vmatprep.subr.bf16.mxu0 0
  %1225 = vmatpush1.bf16.msra.mxu0 0
  %1226 = vmatprep.subr.bf16.mxu0 0
  %1227 = vmatpush1.bf16.msra.mxu0 0
  %1228 = vmatprep.subr.bf16.mxu0 0
  %1229 = vmatpush1.bf16.msra.mxu0 %v1212
  %1230 = vmatprep.subr.bf16.mxu0 0
  %1231 = vmatpush2.bf16.msra.mxu0 0
  %1232 = vmatprep.subr.bf16.mxu0 0
  %1233 = vmatpush2.bf16.msra.mxu0 0
  %1234 = vmatprep.subr.bf16.mxu0 0
  %1235 = vmatpush2.bf16.msra.mxu0 0
  %1236 = vmatprep.subr.bf16.mxu0 0
  %1237 = vmatpush2.bf16.msra.mxu0 0
  %1238 = vmatprep.subr.bf16.mxu0 0
  %1239 = vmatpush2.bf16.msra.mxu0 0
  %1240 = vmatprep.subr.bf16.mxu0 0
  %1241 = vmatpush2.bf16.msra.mxu0 0
  %1242 = vmatprep.subr.bf16.mxu0 0
  %1243 = vmatpush2.bf16.msra.mxu0 0
  %1244 = vmatprep.subr.bf16.mxu0 0
  %1245 = vmatpush2.bf16.msra.mxu0 0
  %1246 = vmatprep.mubr.bf16.mxu0 0
  %1247 = vmatmul.mubr.bf16.gmra.mxu0 %v812
  %v1248 = vpop.f32.mrf.mxu0
  %v1249 = vadd.f32 0.0, %v1248
  %v1250 = vpop.f32.mrf.mxu0
  %v1251 = vpop.f32.mrf.mxu0
  %v1252 = vadd.f32 0.0, %v1251
  %v1253 = vpop.f32.mrf.mxu0
  %1254 = vmatprep.mubr.bf16.mxu0 0
  %1255 = vmatmul.mubr.bf16.gmra.mxu0 %v815
  %v1256 = vpop.f32.mrf.mxu0
  %v1257 = vadd.f32 0.0, %v1256
  %v1258 = vpop.f32.mrf.mxu0
  %v1259 = vpop.f32.mrf.mxu0
  %v1260 = vadd.f32 0.0, %v1259
  %v1261 = vpop.f32.mrf.mxu0
  %1262 = vmatprep.mubr.bf16.mxu0 0
  %1263 = vmatmul.mubr.bf16.gmra.mxu0 %v818
  %v1264 = vpop.f32.mrf.mxu0
  %v1265 = vadd.f32 0.0, %v1264
  %v1266 = vpop.f32.mrf.mxu0
  %v1267 = vpop.f32.mrf.mxu0
  %v1268 = vadd.f32 0.0, %v1267
  %v1269 = vpop.f32.mrf.mxu0
  %1270 = vmatprep.mubr.bf16.mxu0 0
  %1271 = vmatmul.mubr.bf16.gmra.mxu0 %v821
  %v1272 = vpop.f32.mrf.mxu0
  %v1273 = vadd.f32 0.0, %v1272
  %v1274 = vpop.f32.mrf.mxu0
  %v1275 = vpop.f32.mrf.mxu0
  %v1276 = vadd.f32 0.0, %v1275
  %v1277 = vpop.f32.mrf.mxu0
  %1278 = vmatprep.mubr.bf16.mxu0 0
  %1279 = vmatmul.mubr.bf16.gmra.mxu0 %v824
  %v1280 = vpop.f32.mrf.mxu0
  %v1281 = vadd.f32 0.0, %v1280
  %v1282 = vpop.f32.mrf.mxu0
  %v1283 = vpop.f32.mrf.mxu0
  %v1284 = vadd.f32 0.0, %v1283
  %v1285 = vpop.f32.mrf.mxu0
  %1286 = vmatprep.mubr.bf16.mxu0 0
  %1287 = vmatmul.mubr.bf16.gmra.mxu0 %v827
  %v1288 = vpop.f32.mrf.mxu0
  %v1289 = vadd.f32 0.0, %v1288
  %v1290 = vpop.f32.mrf.mxu0
  %v1291 = vpop.f32.mrf.mxu0
  %v1292 = vadd.f32 0.0, %v1291
  %v1293 = vpop.f32.mrf.mxu0
  %1294 = vmatprep.mubr.bf16.mxu0 0
  %1295 = vmatmul.mubr.bf16.gmra.mxu0 %v830
  %v1296 = vpop.f32.mrf.mxu0
  %v1297 = vadd.f32 0.0, %v1296
  %v1298 = vpop.f32.mrf.mxu0
  %v1299 = vpop.f32.mrf.mxu0
  %v1300 = vadd.f32 0.0, %v1299
  %v1301 = vpop.f32.mrf.mxu0
  %1302 = vmatprep.mubr.bf16.mxu0 0
  %1303 = vmatmul.mubr.bf16.gmra.mxu0 %v833
  %v1304 = vpop.f32.mrf.mxu0
  %v1305 = vadd.f32 0.0, %v1304
  %v1306 = vpop.f32.mrf.mxu0
  %v1307 = vpop.f32.mrf.mxu0
  %v1308 = vadd.f32 0.0, %v1307
  %v1309 = vpop.f32.mrf.mxu0
  %1310 = vdwg.mxu0
  %v1311 = vadd.f32 %v1190, %v1249
  %v1312 = vadd.f32 %v1191, %v1252
  %v1313 = vadd.f32 %v1192, %v1257
  %v1314 = vadd.f32 %v1193, %v1260
  %v1315 = vadd.f32 %v1194, %v1265
  %v1316 = vadd.f32 %v1195, %v1268
  %v1317 = vadd.f32 %v1196, %v1273
  %v1318 = vadd.f32 %v1197, %v1276
  %v1319 = vadd.f32 %v1198, %v1281
  %v1320 = vadd.f32 %v1199, %v1284
  %v1321 = vadd.f32 %v1200, %v1289
  %v1322 = vadd.f32 %v1201, %v1292
  %v1323 = vadd.f32 %v1202, %v1297
  %v1324 = vadd.f32 %v1203, %v1300
  %v1325 = vadd.f32 %v1204, %v1305
  %v1326 = vadd.f32 %v1205, %v1308
  %v1327 = vld [vmem:[%s11] sm:$0x1]
  %v1329 = vlaneseq
  %v1330 = vshrl.u32 %v1329, 7
  %v1331 = vsub.s32 0, %v1330
  %v1332 = vrot.slane %v1327, %v1331
  %v1334 = vadd.f32 %v1311, %v1332
  %v1335 = vadd.f32 %v1312, %v1332
  %v1336 = vadd.f32 %v1313, %v1332
  %v1337 = vadd.f32 %v1314, %v1332
  %v1338 = vadd.f32 %v1315, %v1332
  %v1339 = vadd.f32 %v1316, %v1332
  %v1340 = vadd.f32 %v1317, %v1332
  %v1341 = vadd.f32 %v1318, %v1332
  %v1342 = vadd.f32 %v1319, %v1332
  %v1343 = vadd.f32 %v1320, %v1332
  %v1344 = vadd.f32 %v1321, %v1332
  %v1345 = vadd.f32 %v1322, %v1332
  %v1346 = vadd.f32 %v1323, %v1332
  %v1347 = vadd.f32 %v1324, %v1332
  %v1348 = vadd.f32 %v1325, %v1332
  %v1349 = vadd.f32 %v1326, %v1332
  %v1350 = vmax.f32 %v1334, 0.0
  %v1351 = vmax.f32 %v1335, 0.0
  %v1352 = vmax.f32 %v1336, 0.0
  %v1353 = vmax.f32 %v1337, 0.0
  %v1354 = vmax.f32 %v1338, 0.0
  %v1355 = vmax.f32 %v1339, 0.0
  %v1356 = vmax.f32 %v1340, 0.0
  %v1357 = vmax.f32 %v1341, 0.0
  %v1358 = vmax.f32 %v1342, 0.0
  %v1359 = vmax.f32 %v1343, 0.0
  %v1360 = vmax.f32 %v1344, 0.0
  %v1361 = vmax.f32 %v1345, 0.0
  %v1362 = vmax.f32 %v1346, 0.0
  %v1363 = vmax.f32 %v1347, 0.0
  %v1364 = vmax.f32 %v1348, 0.0
  %v1365 = vmax.f32 %v1349, 0.0
  %v1366 = vpack.c.bf16 %v1351, %v1350
  %v1367 = vpack.c.bf16 %v1353, %v1352
  %v1368 = vpack.c.bf16 %v1355, %v1354
  %v1369 = vpack.c.bf16 %v1357, %v1356
  %v1370 = vpack.c.bf16 %v1359, %v1358
  %v1371 = vpack.c.bf16 %v1361, %v1360
  %v1372 = vpack.c.bf16 %v1363, %v1362
  %v1373 = vpack.c.bf16 %v1365, %v1364
  %v1374 = vld [vmem:[%s13] sm:$0xf]
  %v1375 = vld [vmem:[%s13 + $0x4] sm:$0xf]
  %v1376 = vld [vmem:[%s14] sm:$0x1]
  %v1378 = vlaneseq
  %v1379 = vshrl.u32 %v1378, 7
  %v1380 = vsub.s32 0, %v1379
  %v1381 = vrot.slane %v1376, %v1380
  %v1385 = vunpack.c.l.b16 %v1374
  %v1386 = vunpack.c.l.b16 %v1375
  %v1387 = vpack.c.b16 %v1386, %v1385
  %v1390 = vsel %vm810, %v1366, 0
  %v1393 = vsel %vm810, %v1367, 0
  %v1396 = vsel %vm810, %v1368, 0
  %v1399 = vsel %vm810, %v1369, 0
  %v1402 = vsel %vm810, %v1370, 0
  %v1405 = vsel %vm810, %v1371, 0
  %v1408 = vsel %vm810, %v1372, 0
  %v1411 = vsel %vm810, %v1373, 0
  %1413 = vmatprep.subr.bf16.mxu0 0
  %1414 = vmatpush1.bf16.msra.mxu0 0
  %1415 = vmatprep.subr.bf16.mxu0 0
  %1416 = vmatpush1.bf16.msra.mxu0 0
  %1417 = vmatprep.subr.bf16.mxu0 0
  %1418 = vmatpush1.bf16.msra.mxu0 0
  %1419 = vmatprep.subr.bf16.mxu0 0
  %1420 = vmatpush1.bf16.msra.mxu0 0
  %1421 = vmatprep.subr.bf16.mxu0 0
  %1422 = vmatpush1.bf16.msra.mxu0 0
  %1423 = vmatprep.subr.bf16.mxu0 0
  %1424 = vmatpush1.bf16.msra.mxu0 0
  %1425 = vmatprep.subr.bf16.mxu0 0
  %1426 = vmatpush1.bf16.msra.mxu0 0
  %1427 = vmatprep.subr.bf16.mxu0 0
  %1428 = vmatpush1.bf16.msra.mxu0 %v1387
  %1429 = vmatprep.subr.bf16.mxu0 0
  %1430 = vmatpush2.bf16.msra.mxu0 0
  %1431 = vmatprep.subr.bf16.mxu0 0
  %1432 = vmatpush2.bf16.msra.mxu0 0
  %1433 = vmatprep.subr.bf16.mxu0 0
  %1434 = vmatpush2.bf16.msra.mxu0 0
  %1435 = vmatprep.subr.bf16.mxu0 0
  %1436 = vmatpush2.bf16.msra.mxu0 0
  %1437 = vmatprep.subr.bf16.mxu0 0
  %1438 = vmatpush2.bf16.msra.mxu0 0
  %1439 = vmatprep.subr.bf16.mxu0 0
  %1440 = vmatpush2.bf16.msra.mxu0 0
  %1441 = vmatprep.subr.bf16.mxu0 0
  %1442 = vmatpush2.bf16.msra.mxu0 0
  %1443 = vmatprep.subr.bf16.mxu0 0
  %1444 = vmatpush2.bf16.msra.mxu0 0
  %1445 = vmatprep.mubr.bf16.mxu0 0
  %1446 = vmatmul.mubr.bf16.gmra.mxu0 %v1390
  %v1447 = vpop.f32.mrf.mxu0
  %v1448 = vadd.f32 %v1381, %v1447
  %v1449 = vpop.f32.mrf.mxu0
  %v1450 = vpop.f32.mrf.mxu0
  %v1451 = vadd.f32 %v1381, %v1450
  %v1452 = vpop.f32.mrf.mxu0
  %1453 = vmatprep.mubr.bf16.mxu0 0
  %1454 = vmatmul.mubr.bf16.gmra.mxu0 %v1393
  %v1455 = vpop.f32.mrf.mxu0
  %v1456 = vadd.f32 %v1381, %v1455
  %v1457 = vpop.f32.mrf.mxu0
  %v1458 = vpop.f32.mrf.mxu0
  %v1459 = vadd.f32 %v1381, %v1458
  %v1460 = vpop.f32.mrf.mxu0
  %1461 = vmatprep.mubr.bf16.mxu0 0
  %1462 = vmatmul.mubr.bf16.gmra.mxu0 %v1396
  %v1463 = vpop.f32.mrf.mxu0
  %v1464 = vadd.f32 %v1381, %v1463
  %v1465 = vpop.f32.mrf.mxu0
  %v1466 = vpop.f32.mrf.mxu0
  %v1467 = vadd.f32 %v1381, %v1466
  %v1468 = vpop.f32.mrf.mxu0
  %1469 = vmatprep.mubr.bf16.mxu0 0
  %1470 = vmatmul.mubr.bf16.gmra.mxu0 %v1399
  %v1471 = vpop.f32.mrf.mxu0
  %v1472 = vadd.f32 %v1381, %v1471
  %v1473 = vpop.f32.mrf.mxu0
  %v1474 = vpop.f32.mrf.mxu0
  %v1475 = vadd.f32 %v1381, %v1474
  %v1476 = vpop.f32.mrf.mxu0
  %1477 = vmatprep.mubr.bf16.mxu0 0
  %1478 = vmatmul.mubr.bf16.gmra.mxu0 %v1402
  %v1479 = vpop.f32.mrf.mxu0
  %v1480 = vadd.f32 %v1381, %v1479
  %v1481 = vpop.f32.mrf.mxu0
  %v1482 = vpop.f32.mrf.mxu0
  %v1483 = vadd.f32 %v1381, %v1482
  %v1484 = vpop.f32.mrf.mxu0
  %1485 = vmatprep.mubr.bf16.mxu0 0
  %1486 = vmatmul.mubr.bf16.gmra.mxu0 %v1405
  %v1487 = vpop.f32.mrf.mxu0
  %v1488 = vadd.f32 %v1381, %v1487
  %v1489 = vpop.f32.mrf.mxu0
  %v1490 = vpop.f32.mrf.mxu0
  %v1491 = vadd.f32 %v1381, %v1490
  %v1492 = vpop.f32.mrf.mxu0
  %1493 = vmatprep.mubr.bf16.mxu0 0
  %1494 = vmatmul.mubr.bf16.gmra.mxu0 %v1408
  %v1495 = vpop.f32.mrf.mxu0
  %v1496 = vadd.f32 %v1381, %v1495
  %v1497 = vpop.f32.mrf.mxu0
  %v1498 = vpop.f32.mrf.mxu0
  %v1499 = vadd.f32 %v1381, %v1498
  %v1500 = vpop.f32.mrf.mxu0
  %1501 = vmatprep.mubr.bf16.mxu0 0
  %1502 = vmatmul.mubr.bf16.gmra.mxu0 %v1411
  %v1503 = vpop.f32.mrf.mxu0
  %v1504 = vadd.f32 %v1381, %v1503
  %v1505 = vpop.f32.mrf.mxu0
  %v1506 = vpop.f32.mrf.mxu0
  %v1507 = vadd.f32 %v1381, %v1506
  %v1508 = vpop.f32.mrf.mxu0
  %1509 = vdwg.mxu0
  %v1510 = vmax.f32 %v1448, 0.0
  %v1511 = vmax.f32 %v1451, 0.0
  %v1512 = vmax.f32 %v1456, 0.0
  %v1513 = vmax.f32 %v1459, 0.0
  %v1514 = vmax.f32 %v1464, 0.0
  %v1515 = vmax.f32 %v1467, 0.0
  %v1516 = vmax.f32 %v1472, 0.0
  %v1517 = vmax.f32 %v1475, 0.0
  %v1518 = vmax.f32 %v1480, 0.0
  %v1519 = vmax.f32 %v1483, 0.0
  %v1520 = vmax.f32 %v1488, 0.0
  %v1521 = vmax.f32 %v1491, 0.0
  %v1522 = vmax.f32 %v1496, 0.0
  %v1523 = vmax.f32 %v1499, 0.0
  %v1524 = vmax.f32 %v1504, 0.0
  %v1525 = vmax.f32 %v1507, 0.0
  %v1526 = vpack.c.bf16 %v1511, %v1510
  %v1527 = vpack.c.bf16 %v1513, %v1512
  %v1528 = vpack.c.bf16 %v1515, %v1514
  %v1529 = vpack.c.bf16 %v1517, %v1516
  %v1530 = vpack.c.bf16 %v1519, %v1518
  %v1531 = vpack.c.bf16 %v1521, %v1520
  %v1532 = vpack.c.bf16 %v1523, %v1522
  %v1533 = vpack.c.bf16 %v1525, %v1524
  %v1534 = vld [vmem:[%s15] sm:$0xf]
  %v1535 = vld [vmem:[%s15 + $0x4] sm:$0xf]
  %v1538 = vunpack.c.l.b16 %v1534
  %v1539 = vunpack.c.l.b16 %v1535
  %v1540 = vpack.c.b16 %v1539, %v1538
  %v1543 = vsel %vm810, %v1526, 0
  %v1546 = vsel %vm810, %v1527, 0
  %v1549 = vsel %vm810, %v1528, 0
  %v1552 = vsel %vm810, %v1529, 0
  %v1555 = vsel %vm810, %v1530, 0
  %v1558 = vsel %vm810, %v1531, 0
  %v1561 = vsel %vm810, %v1532, 0
  %v1564 = vsel %vm810, %v1533, 0
  %1566 = vmatprep.subr.bf16.mxu0 0
  %1567 = vmatpush1.bf16.msra.mxu0 0
  %1568 = vmatprep.subr.bf16.mxu0 0
  %1569 = vmatpush1.bf16.msra.mxu0 0
  %1570 = vmatprep.subr.bf16.mxu0 0
  %1571 = vmatpush1.bf16.msra.mxu0 0
  %1572 = vmatprep.subr.bf16.mxu0 0
  %1573 = vmatpush1.bf16.msra.mxu0 0
  %1574 = vmatprep.subr.bf16.mxu0 0
  %1575 = vmatpush1.bf16.msra.mxu0 0
  %1576 = vmatprep.subr.bf16.mxu0 0
  %1577 = vmatpush1.bf16.msra.mxu0 0
  %1578 = vmatprep.subr.bf16.mxu0 0
  %1579 = vmatpush1.bf16.msra.mxu0 0
  %1580 = vmatprep.subr.bf16.mxu0 0
  %1581 = vmatpush1.bf16.msra.mxu0 %v1540
  %1582 = vmatprep.subr.bf16.mxu0 0
  %1583 = vmatpush2.bf16.msra.mxu0 0
  %1584 = vmatprep.subr.bf16.mxu0 0
  %1585 = vmatpush2.bf16.msra.mxu0 0
  %1586 = vmatprep.subr.bf16.mxu0 0
  %1587 = vmatpush2.bf16.msra.mxu0 0
  %1588 = vmatprep.subr.bf16.mxu0 0
  %1589 = vmatpush2.bf16.msra.mxu0 0
  %1590 = vmatprep.subr.bf16.mxu0 0
  %1591 = vmatpush2.bf16.msra.mxu0 0
  %1592 = vmatprep.subr.bf16.mxu0 0
  %1593 = vmatpush2.bf16.msra.mxu0 0
  %1594 = vmatprep.subr.bf16.mxu0 0
  %1595 = vmatpush2.bf16.msra.mxu0 0
  %1596 = vmatprep.subr.bf16.mxu0 0
  %1597 = vmatpush2.bf16.msra.mxu0 0
  %1598 = vmatprep.mubr.bf16.mxu0 0
  %1599 = vmatmul.mubr.bf16.gmra.mxu0 %v1543
  %v1600 = vpop.f32.mrf.mxu0
  %v1601 = vadd.f32 0.0, %v1600
  %v1602 = vpop.f32.mrf.mxu0
  %v1603 = vpop.f32.mrf.mxu0
  %v1604 = vadd.f32 0.0, %v1603
  %v1605 = vpop.f32.mrf.mxu0
  %1606 = vmatprep.mubr.bf16.mxu0 0
  %1607 = vmatmul.mubr.bf16.gmra.mxu0 %v1546
  %v1608 = vpop.f32.mrf.mxu0
  %v1609 = vadd.f32 0.0, %v1608
  %v1610 = vpop.f32.mrf.mxu0
  %v1611 = vpop.f32.mrf.mxu0
  %v1612 = vadd.f32 0.0, %v1611
  %v1613 = vpop.f32.mrf.mxu0
  %1614 = vmatprep.mubr.bf16.mxu0 0
  %1615 = vmatmul.mubr.bf16.gmra.mxu0 %v1549
  %v1616 = vpop.f32.mrf.mxu0
  %v1617 = vadd.f32 0.0, %v1616
  %v1618 = vpop.f32.mrf.mxu0
  %v1619 = vpop.f32.mrf.mxu0
  %v1620 = vadd.f32 0.0, %v1619
  %v1621 = vpop.f32.mrf.mxu0
  %1622 = vmatprep.mubr.bf16.mxu0 0
  %1623 = vmatmul.mubr.bf16.gmra.mxu0 %v1552
  %v1624 = vpop.f32.mrf.mxu0
  %v1625 = vadd.f32 0.0, %v1624
  %v1626 = vpop.f32.mrf.mxu0
  %v1627 = vpop.f32.mrf.mxu0
  %v1628 = vadd.f32 0.0, %v1627
  %v1629 = vpop.f32.mrf.mxu0
  %1630 = vmatprep.mubr.bf16.mxu0 0
  %1631 = vmatmul.mubr.bf16.gmra.mxu0 %v1555
  %v1632 = vpop.f32.mrf.mxu0
  %v1633 = vadd.f32 0.0, %v1632
  %v1634 = vpop.f32.mrf.mxu0
  %v1635 = vpop.f32.mrf.mxu0
  %v1636 = vadd.f32 0.0, %v1635
  %v1637 = vpop.f32.mrf.mxu0
  %1638 = vmatprep.mubr.bf16.mxu0 0
  %1639 = vmatmul.mubr.bf16.gmra.mxu0 %v1558
  %v1640 = vpop.f32.mrf.mxu0
  %v1641 = vadd.f32 0.0, %v1640
  %v1642 = vpop.f32.mrf.mxu0
  %v1643 = vpop.f32.mrf.mxu0
  %v1644 = vadd.f32 0.0, %v1643
  %v1645 = vpop.f32.mrf.mxu0
  %1646 = vmatprep.mubr.bf16.mxu0 0
  %1647 = vmatmul.mubr.bf16.gmra.mxu0 %v1561
  %v1648 = vpop.f32.mrf.mxu0
  %v1649 = vadd.f32 0.0, %v1648
  %v1650 = vpop.f32.mrf.mxu0
  %v1651 = vpop.f32.mrf.mxu0
  %v1652 = vadd.f32 0.0, %v1651
  %v1653 = vpop.f32.mrf.mxu0
  %1654 = vmatprep.mubr.bf16.mxu0 0
  %1655 = vmatmul.mubr.bf16.gmra.mxu0 %v1564
  %v1656 = vpop.f32.mrf.mxu0
  %v1657 = vadd.f32 0.0, %v1656
  %v1658 = vpop.f32.mrf.mxu0
  %v1659 = vpop.f32.mrf.mxu0
  %v1660 = vadd.f32 0.0, %v1659
  %v1661 = vpop.f32.mrf.mxu0
  %1662 = vdwg.mxu0
  %v1663 = vpack.c.bf16 %v1604, %v1601
  %v1664 = vpack.c.bf16 %v1612, %v1609
  %v1665 = vpack.c.bf16 %v1620, %v1617
  %v1666 = vpack.c.bf16 %v1628, %v1625
  %v1667 = vpack.c.bf16 %v1636, %v1633
  %v1668 = vpack.c.bf16 %v1644, %v1641
  %v1669 = vpack.c.bf16 %v1652, %v1649
  %v1670 = vpack.c.bf16 %v1660, %v1657
  %1671 = vmatprep.subr.bf16.mxu0 0
  %1672 = vmatpush1.bf16.msra.mxu0 %v1670
  %1673 = vmatprep.subr.bf16.mxu0 0
  %1674 = vmatpush1.bf16.msra.mxu0 %v1669
  %1675 = vmatprep.subr.bf16.mxu0 0
  %1676 = vmatpush1.bf16.msra.mxu0 %v1668
  %1677 = vmatprep.subr.bf16.mxu0 0
  %1678 = vmatpush1.bf16.msra.mxu0 %v1667
  %1679 = vmatprep.subr.bf16.mxu0 0
  %1680 = vmatpush1.bf16.msra.mxu0 %v1666
  %1681 = vmatprep.subr.bf16.mxu0 0
  %1682 = vmatpush1.bf16.msra.mxu0 %v1665
  %1683 = vmatprep.subr.bf16.mxu0 0
  %1684 = vmatpush1.bf16.msra.mxu0 %v1664
  %1685 = vmatprep.subr.bf16.mxu0 0
  %1686 = vmatpush1.bf16.msra.mxu0 %v1663
  %1687 = vmatprep.subr.bf16.mxu0 0
  %1688 = vmatpush2.bf16.msra.mxu0 0
  %1689 = vmatprep.subr.bf16.mxu0 0
  %1690 = vmatpush2.bf16.msra.mxu0 0
  %1691 = vmatprep.subr.bf16.mxu0 0
  %1692 = vmatpush2.bf16.msra.mxu0 0
  %1693 = vmatprep.subr.bf16.mxu0 0
  %1694 = vmatpush2.bf16.msra.mxu0 0
  %1695 = vmatprep.subr.bf16.mxu0 0
  %1696 = vmatpush2.bf16.msra.mxu0 0
  %1697 = vmatprep.subr.bf16.mxu0 0
  %1698 = vmatpush2.bf16.msra.mxu0 0
  %1699 = vmatprep.subr.bf16.mxu0 0
  %1700 = vmatpush2.bf16.msra.mxu0 0
  %1701 = vmatprep.subr.bf16.mxu0 0
  %1702 = vmatpush2.bf16.msra.mxu0 0
  %1703 = vmatprep.mubr.bf16.mxu0 0
  %1704 = vmatmul.mubr.bf16.gmra.mxu0 %v64
  %v1705 = vpop.f32.mrf.mxu0
  %v1706 = vadd.f32 0.0, %v1705
  %v1707 = vpop.f32.mrf.mxu0
  %v1708 = vpop.f32.mrf.mxu0
  %v1709 = vadd.f32 0.0, %v1708
  %v1710 = vpop.f32.mrf.mxu0
  %1711 = vmatprep.mubr.bf16.mxu0 0
  %1712 = vmatmul.mubr.bf16.gmra.mxu0 %v65
  %v1713 = vpop.f32.mrf.mxu0
  %v1714 = vadd.f32 0.0, %v1713
  %v1715 = vpop.f32.mrf.mxu0
  %v1716 = vpop.f32.mrf.mxu0
  %v1717 = vadd.f32 0.0, %v1716
  %v1718 = vpop.f32.mrf.mxu0
  %1719 = vmatprep.mubr.bf16.mxu0 0
  %1720 = vmatmul.mubr.bf16.gmra.mxu0 %v66
  %v1721 = vpop.f32.mrf.mxu0
  %v1722 = vadd.f32 0.0, %v1721
  %v1723 = vpop.f32.mrf.mxu0
  %v1724 = vpop.f32.mrf.mxu0
  %v1725 = vadd.f32 0.0, %v1724
  %v1726 = vpop.f32.mrf.mxu0
  %1727 = vmatprep.mubr.bf16.mxu0 0
  %1728 = vmatmul.mubr.bf16.gmra.mxu0 %v67
  %v1729 = vpop.f32.mrf.mxu0
  %v1730 = vadd.f32 0.0, %v1729
  %v1731 = vpop.f32.mrf.mxu0
  %v1732 = vpop.f32.mrf.mxu0
  %v1733 = vadd.f32 0.0, %v1732
  %v1734 = vpop.f32.mrf.mxu0
  %1735 = vmatprep.mubr.bf16.mxu0 0
  %1736 = vmatmul.mubr.bf16.gmra.mxu0 %v68
  %v1737 = vpop.f32.mrf.mxu0
  %v1738 = vadd.f32 0.0, %v1737
  %v1739 = vpop.f32.mrf.mxu0
  %v1740 = vpop.f32.mrf.mxu0
  %v1741 = vadd.f32 0.0, %v1740
  %v1742 = vpop.f32.mrf.mxu0
  %1743 = vmatprep.mubr.bf16.mxu0 0
  %1744 = vmatmul.mubr.bf16.gmra.mxu0 %v69
  %v1745 = vpop.f32.mrf.mxu0
  %v1746 = vadd.f32 0.0, %v1745
  %v1747 = vpop.f32.mrf.mxu0
  %v1748 = vpop.f32.mrf.mxu0
  %v1749 = vadd.f32 0.0, %v1748
  %v1750 = vpop.f32.mrf.mxu0
  %1751 = vmatprep.mubr.bf16.mxu0 0
  %1752 = vmatmul.mubr.bf16.gmra.mxu0 %v70
  %v1753 = vpop.f32.mrf.mxu0
  %v1754 = vadd.f32 0.0, %v1753
  %v1755 = vpop.f32.mrf.mxu0
  %v1756 = vpop.f32.mrf.mxu0
  %v1757 = vadd.f32 0.0, %v1756
  %v1758 = vpop.f32.mrf.mxu0
  %1759 = vmatprep.mubr.bf16.mxu0 0
  %1760 = vmatmul.mubr.bf16.gmra.mxu0 %v71
  %v1761 = vpop.f32.mrf.mxu0
  %v1762 = vadd.f32 0.0, %v1761
  %v1763 = vpop.f32.mrf.mxu0
  %v1764 = vpop.f32.mrf.mxu0
  %v1765 = vadd.f32 0.0, %v1764
  %v1766 = vpop.f32.mrf.mxu0
  %1767 = vdwg.mxu0
  %v1768 = vmul.f32 %v1706, %v538
  %v1769 = vmul.f32 %v1709, %v543
  %v1770 = vmul.f32 %v1714, %v548
  %v1771 = vmul.f32 %v1717, %v553
  %v1772 = vmul.f32 %v1722, %v558
  %v1773 = vmul.f32 %v1725, %v563
  %v1774 = vmul.f32 %v1730, %v568
  %v1775 = vmul.f32 %v1733, %v573
  %v1776 = vmul.f32 %v1738, %v578
  %v1777 = vmul.f32 %v1741, %v583
  %v1778 = vmul.f32 %v1746, %v588
  %v1779 = vmul.f32 %v1749, %v593
  %v1780 = vmul.f32 %v1754, %v598
  %v1781 = vmul.f32 %v1757, %v603
  %v1782 = vmul.f32 %v1762, %v608
  %v1783 = vmul.f32 %v1765, %v613
  %v1784 = vld [vmem:[%s17] sm:$0xf]
  %v1785 = vld [vmem:[%s17 + $0x4] sm:$0xf]
  %v1788 = vunpack.c.l.b16 %v1784
  %v1789 = vunpack.c.l.b16 %v1785
  %v1790 = vpack.c.b16 %v1789, %v1788
  %1792 = vmatprep.subr.bf16.mxu0 0
  %1793 = vmatpush1.bf16.msra.mxu0 0
  %1794 = vmatprep.subr.bf16.mxu0 0
  %1795 = vmatpush1.bf16.msra.mxu0 0
  %1796 = vmatprep.subr.bf16.mxu0 0
  %1797 = vmatpush1.bf16.msra.mxu0 0
  %1798 = vmatprep.subr.bf16.mxu0 0
  %1799 = vmatpush1.bf16.msra.mxu0 0
  %1800 = vmatprep.subr.bf16.mxu0 0
  %1801 = vmatpush1.bf16.msra.mxu0 0
  %1802 = vmatprep.subr.bf16.mxu0 0
  %1803 = vmatpush1.bf16.msra.mxu0 0
  %1804 = vmatprep.subr.bf16.mxu0 0
  %1805 = vmatpush1.bf16.msra.mxu0 0
  %1806 = vmatprep.subr.bf16.mxu0 0
  %1807 = vmatpush1.bf16.msra.mxu0 %v1790
  %1808 = vmatprep.subr.bf16.mxu0 0
  %1809 = vmatpush2.bf16.msra.mxu0 0
  %1810 = vmatprep.subr.bf16.mxu0 0
  %1811 = vmatpush2.bf16.msra.mxu0 0
  %1812 = vmatprep.subr.bf16.mxu0 0
  %1813 = vmatpush2.bf16.msra.mxu0 0
  %1814 = vmatprep.subr.bf16.mxu0 0
  %1815 = vmatpush2.bf16.msra.mxu0 0
  %1816 = vmatprep.subr.bf16.mxu0 0
  %1817 = vmatpush2.bf16.msra.mxu0 0
  %1818 = vmatprep.subr.bf16.mxu0 0
  %1819 = vmatpush2.bf16.msra.mxu0 0
  %1820 = vmatprep.subr.bf16.mxu0 0
  %1821 = vmatpush2.bf16.msra.mxu0 0
  %1822 = vmatprep.subr.bf16.mxu0 0
  %1823 = vmatpush2.bf16.msra.mxu0 0
  %1824 = vmatprep.mubr.bf16.mxu0 0
  %1825 = vmatmul.mubr.bf16.gmra.mxu0 %v1390
  %v1826 = vpop.f32.mrf.mxu0
  %v1827 = vadd.f32 0.0, %v1826
  %v1828 = vpop.f32.mrf.mxu0
  %v1829 = vpop.f32.mrf.mxu0
  %v1830 = vadd.f32 0.0, %v1829
  %v1831 = vpop.f32.mrf.mxu0
  %1832 = vmatprep.mubr.bf16.mxu0 0
  %1833 = vmatmul.mubr.bf16.gmra.mxu0 %v1393
  %v1834 = vpop.f32.mrf.mxu0
  %v1835 = vadd.f32 0.0, %v1834
  %v1836 = vpop.f32.mrf.mxu0
  %v1837 = vpop.f32.mrf.mxu0
  %v1838 = vadd.f32 0.0, %v1837
  %v1839 = vpop.f32.mrf.mxu0
  %1840 = vmatprep.mubr.bf16.mxu0 0
  %1841 = vmatmul.mubr.bf16.gmra.mxu0 %v1396
  %v1842 = vpop.f32.mrf.mxu0
  %v1843 = vadd.f32 0.0, %v1842
  %v1844 = vpop.f32.mrf.mxu0
  %v1845 = vpop.f32.mrf.mxu0
  %v1846 = vadd.f32 0.0, %v1845
  %v1847 = vpop.f32.mrf.mxu0
  %1848 = vmatprep.mubr.bf16.mxu0 0
  %1849 = vmatmul.mubr.bf16.gmra.mxu0 %v1399
  %v1850 = vpop.f32.mrf.mxu0
  %v1851 = vadd.f32 0.0, %v1850
  %v1852 = vpop.f32.mrf.mxu0
  %v1853 = vpop.f32.mrf.mxu0
  %v1854 = vadd.f32 0.0, %v1853
  %v1855 = vpop.f32.mrf.mxu0
  %1856 = vmatprep.mubr.bf16.mxu0 0
  %1857 = vmatmul.mubr.bf16.gmra.mxu0 %v1402
  %v1858 = vpop.f32.mrf.mxu0
  %v1859 = vadd.f32 0.0, %v1858
  %v1860 = vpop.f32.mrf.mxu0
  %v1861 = vpop.f32.mrf.mxu0
  %v1862 = vadd.f32 0.0, %v1861
  %v1863 = vpop.f32.mrf.mxu0
  %1864 = vmatprep.mubr.bf16.mxu0 0
  %1865 = vmatmul.mubr.bf16.gmra.mxu0 %v1405
  %v1866 = vpop.f32.mrf.mxu0
  %v1867 = vadd.f32 0.0, %v1866
  %v1868 = vpop.f32.mrf.mxu0
  %v1869 = vpop.f32.mrf.mxu0
  %v1870 = vadd.f32 0.0, %v1869
  %v1871 = vpop.f32.mrf.mxu0
  %1872 = vmatprep.mubr.bf16.mxu0 0
  %1873 = vmatmul.mubr.bf16.gmra.mxu0 %v1408
  %v1874 = vpop.f32.mrf.mxu0
  %v1875 = vadd.f32 0.0, %v1874
  %v1876 = vpop.f32.mrf.mxu0
  %v1877 = vpop.f32.mrf.mxu0
  %v1878 = vadd.f32 0.0, %v1877
  %v1879 = vpop.f32.mrf.mxu0
  %1880 = vmatprep.mubr.bf16.mxu0 0
  %1881 = vmatmul.mubr.bf16.gmra.mxu0 %v1411
  %v1882 = vpop.f32.mrf.mxu0
  %v1883 = vadd.f32 0.0, %v1882
  %v1884 = vpop.f32.mrf.mxu0
  %v1885 = vpop.f32.mrf.mxu0
  %v1886 = vadd.f32 0.0, %v1885
  %v1887 = vpop.f32.mrf.mxu0
  %1888 = vdwg.mxu0
  %v1889 = vadd.f32 %v1768, %v1827
  %v1890 = vadd.f32 %v1769, %v1830
  %v1891 = vadd.f32 %v1770, %v1835
  %v1892 = vadd.f32 %v1771, %v1838
  %v1893 = vadd.f32 %v1772, %v1843
  %v1894 = vadd.f32 %v1773, %v1846
  %v1895 = vadd.f32 %v1774, %v1851
  %v1896 = vadd.f32 %v1775, %v1854
  %v1897 = vadd.f32 %v1776, %v1859
  %v1898 = vadd.f32 %v1777, %v1862
  %v1899 = vadd.f32 %v1778, %v1867
  %v1900 = vadd.f32 %v1779, %v1870
  %v1901 = vadd.f32 %v1780, %v1875
  %v1902 = vadd.f32 %v1781, %v1878
  %v1903 = vadd.f32 %v1782, %v1883
  %v1904 = vadd.f32 %v1783, %v1886
  %v1905 = vld [vmem:[%s16] sm:$0x1]
  %v1907 = vlaneseq
  %v1908 = vshrl.u32 %v1907, 7
  %v1909 = vsub.s32 0, %v1908
  %v1910 = vrot.slane %v1905, %v1909
  %v1912 = vadd.f32 %v1889, %v1910
  %v1913 = vadd.f32 %v1890, %v1910
  %v1914 = vadd.f32 %v1891, %v1910
  %v1915 = vadd.f32 %v1892, %v1910
  %v1916 = vadd.f32 %v1893, %v1910
  %v1917 = vadd.f32 %v1894, %v1910
  %v1918 = vadd.f32 %v1895, %v1910
  %v1919 = vadd.f32 %v1896, %v1910
  %v1920 = vadd.f32 %v1897, %v1910
  %v1921 = vadd.f32 %v1898, %v1910
  %v1922 = vadd.f32 %v1899, %v1910
  %v1923 = vadd.f32 %v1900, %v1910
  %v1924 = vadd.f32 %v1901, %v1910
  %v1925 = vadd.f32 %v1902, %v1910
  %v1926 = vadd.f32 %v1903, %v1910
  %v1927 = vadd.f32 %v1904, %v1910
  %v1928 = vxor.u32 %v1912, 2147483648
  %v1929 = vxor.u32 %v1913, 2147483648
  %v1930 = vxor.u32 %v1914, 2147483648
  %v1931 = vxor.u32 %v1915, 2147483648
  %v1932 = vxor.u32 %v1916, 2147483648
  %v1933 = vxor.u32 %v1917, 2147483648
  %v1934 = vxor.u32 %v1918, 2147483648
  %v1935 = vxor.u32 %v1919, 2147483648
  %v1936 = vxor.u32 %v1920, 2147483648
  %v1937 = vxor.u32 %v1921, 2147483648
  %v1938 = vxor.u32 %v1922, 2147483648
  %v1939 = vxor.u32 %v1923, 2147483648
  %v1940 = vxor.u32 %v1924, 2147483648
  %v1941 = vxor.u32 %v1925, 2147483648
  %v1942 = vxor.u32 %v1926, 2147483648
  %v1943 = vxor.u32 %v1927, 2147483648
  %v1944 = vmul.f32 %v1928, 1.442695
  %v1945 = vpow.pop %v1944
  %v1946 = vmul.f32 %v1929, 1.442695
  %v1947 = vpow.pop %v1946
  %v1948 = vmul.f32 %v1930, 1.442695
  %v1949 = vpow.pop %v1948
  %v1950 = vmul.f32 %v1931, 1.442695
  %v1951 = vpow.pop %v1950
  %v1952 = vmul.f32 %v1932, 1.442695
  %v1953 = vpow.pop %v1952
  %v1954 = vmul.f32 %v1933, 1.442695
  %v1955 = vpow.pop %v1954
  %v1956 = vmul.f32 %v1934, 1.442695
  %v1957 = vpow.pop %v1956
  %v1958 = vmul.f32 %v1935, 1.442695
  %v1959 = vpow.pop %v1958
  %v1960 = vmul.f32 %v1936, 1.442695
  %v1961 = vpow.pop %v1960
  %v1962 = vmul.f32 %v1937, 1.442695
  %v1963 = vpow.pop %v1962
  %v1964 = vmul.f32 %v1938, 1.442695
  %v1965 = vpow.pop %v1964
  %v1966 = vmul.f32 %v1939, 1.442695
  %v1967 = vpow.pop %v1966
  %v1968 = vmul.f32 %v1940, 1.442695
  %v1969 = vpow.pop %v1968
  %v1970 = vmul.f32 %v1941, 1.442695
  %v1971 = vpow.pop %v1970
  %v1972 = vmul.f32 %v1942, 1.442695
  %v1973 = vpow.pop %v1972
  %v1974 = vmul.f32 %v1943, 1.442695
  %v1975 = vpow.pop %v1974
  %v1976 = vadd.f32 %v1945, 1.0
  %v1977 = vadd.f32 %v1947, 1.0
  %v1978 = vadd.f32 %v1949, 1.0
  %v1979 = vadd.f32 %v1951, 1.0
  %v1980 = vadd.f32 %v1953, 1.0
  %v1981 = vadd.f32 %v1955, 1.0
  %v1982 = vadd.f32 %v1957, 1.0
  %v1983 = vadd.f32 %v1959, 1.0
  %v1984 = vadd.f32 %v1961, 1.0
  %v1985 = vadd.f32 %v1963, 1.0
  %v1986 = vadd.f32 %v1965, 1.0
  %v1987 = vadd.f32 %v1967, 1.0
  %v1988 = vadd.f32 %v1969, 1.0
  %v1989 = vadd.f32 %v1971, 1.0
  %v1990 = vadd.f32 %v1973, 1.0
  %v1991 = vadd.f32 %v1975, 1.0
  %v1992 = vrcp.pop %v1976
  %v1993 = vmul.f32 1.0, %v1992
  %v1994 = vrcp.pop %v1977
  %v1995 = vmul.f32 1.0, %v1994
  %v1996 = vrcp.pop %v1978
  %v1997 = vmul.f32 1.0, %v1996
  %v1998 = vrcp.pop %v1979
  %v1999 = vmul.f32 1.0, %v1998
  %v2000 = vrcp.pop %v1980
  %v2001 = vmul.f32 1.0, %v2000
  %v2002 = vrcp.pop %v1981
  %v2003 = vmul.f32 1.0, %v2002
  %v2004 = vrcp.pop %v1982
  %v2005 = vmul.f32 1.0, %v2004
  %v2006 = vrcp.pop %v1983
  %v2007 = vmul.f32 1.0, %v2006
  %v2008 = vrcp.pop %v1984
  %v2009 = vmul.f32 1.0, %v2008
  %v2010 = vrcp.pop %v1985
  %v2011 = vmul.f32 1.0, %v2010
  %v2012 = vrcp.pop %v1986
  %v2013 = vmul.f32 1.0, %v2012
  %v2014 = vrcp.pop %v1987
  %v2015 = vmul.f32 1.0, %v2014
  %v2016 = vrcp.pop %v1988
  %v2017 = vmul.f32 1.0, %v2016
  %v2018 = vrcp.pop %v1989
  %v2019 = vmul.f32 1.0, %v2018
  %v2020 = vrcp.pop %v1990
  %v2021 = vmul.f32 1.0, %v2020
  %v2022 = vrcp.pop %v1991
  %v2023 = vmul.f32 1.0, %v2022
  %2024 = vst [vmem:[%s18] sm:$0xff] %v1993
  %2025 = vst [vmem:[%s18 + $0x8] sm:$0xff] %v1995
  %2026 = vst [vmem:[%s18 + $0x10] sm:$0xff] %v1997
  %2027 = vst [vmem:[%s18 + $0x18] sm:$0xff] %v1999
  %2028 = vst [vmem:[%s18 + $0x20] sm:$0xff] %v2001
  %2029 = vst [vmem:[%s18 + $0x28] sm:$0xff] %v2003
  %2030 = vst [vmem:[%s18 + $0x30] sm:$0xff] %v2005
  %2031 = vst [vmem:[%s18 + $0x38] sm:$0xff] %v2007
  %2032 = vst [vmem:[%s18 + $0x40] sm:$0xff] %v2009
  %2033 = vst [vmem:[%s18 + $0x48] sm:$0xff] %v2011
  %2034 = vst [vmem:[%s18 + $0x50] sm:$0xff] %v2013
  %2035 = vst [vmem:[%s18 + $0x58] sm:$0xff] %v2015
  %2036 = vst [vmem:[%s18 + $0x60] sm:$0xff] %v2017
  %2037 = vst [vmem:[%s18 + $0x68] sm:$0xff] %v2019
  %2038 = vst [vmem:[%s18 + $0x70] sm:$0xff] %v2021
  %2039 = vst [vmem:[%s18 + $0x78] sm:$0xff] %v2023
  // Predicated region
  $region74: #{sage_gnn_forward.1} parent=0 // pred_check
    _
  $region75: #{sage_gnn_forward.1} parent=0 // pred_check_branch
    %2041 = sbr.rel (0) target = $region77
  $region76: #{sage_gnn_forward.1} parent=0 // pred_region
    _
  $region77: #{sage_gnn_forward.1} parent=0 // pred_fallthru
    _
  // Predicated region
  $region78: #{sage_gnn_forward.1} parent=0 // pred_check
    _
  $region79: #{sage_gnn_forward.1} parent=0 // pred_check_branch
    %2043 = sbr.rel (0) target = $region81
  $region80: #{sage_gnn_forward.1} parent=0 // pred_region
    _
  $region81: #{sage_gnn_forward.1} parent=0 // pred_fallthru
    _

</llo_original>
